<compile_context>
chip_gen: v7x
topology: tpu7x:2x2x1
jax: 0.10.0
libtpu: 0.0.40
codegen_flags: <defaults>
</compile_context>

<pallas_src>
import functools

import jax
import jax.numpy as jnp
import numpy as np
from jax.experimental import pallas as pl
from jax.experimental.pallas import tpu as pltpu


def _value_head_kernel(x_ref, w_ref, aux_ref, o_ref, *, neg_slope):
  # x_ref  : (B, CHW_pad)   bf16  -- NCHW input, channel-major flatten, padded
  # w_ref  : (CHW_pad, OUT) bf16  -- fused conv(1x1)+lin1 weight
  # aux_ref: (3, OUT)       f32   -- row0: fused bias, row1: lin2 weight,
  #                                  row2: lin2 bias broadcast across lanes
  # o_ref  : (B, 1)         f32
  # Fused conv+lin1: one lane-aligned MXU matmul with f32 accumulation.
  h1 = jnp.dot(x_ref[...], w_ref[...],
               preferred_element_type=jnp.float32)                  # (B, OUT)
  h1 = h1 + aux_ref[0:1, :]                                         # f32 bias
  h1 = jnp.where(h1 > 0, h1, neg_slope * h1)                        # LeakyReLU
  # Linear(OUT -> 1): VPU mul + cross-lane reduce (no N=1 MXU matmul).
  h2 = jnp.sum(h1 * aux_ref[1:2, :], axis=-1, keepdims=True)        # (B, 1)
  h2 = h2 + aux_ref[2:3, 0:1]
  o_ref[...] = jnp.tanh(h2)                                         # EUP


def prepare_value_head_params(conv_w, conv_b, lin1_w, lin1_b, lin2_w, lin2_b,
                              H, W):
  """One-time parameter fusion (run at load time, NOT per forward call).

  Returns:
    w_bf: (CHW_pad, OUT) bf16 fused conv(1x1)+lin1 weight, lane-padded.
    aux : (3, OUT) f32 -- [fused bias; lin2 weight row; lin2 bias broadcast].
  """
  K, C = conv_w.shape[0], conv_w.shape[1]
  HW = H * W
  OUT, HID = lin1_w.shape
  assert HID == K * HW, (HID, K, HW)
  CHW = C * HW
  CHW_pad = ((CHW + 255) // 256) * 256          # 3150 -> 3328 (256-deep tiles)

  wc = conv_w.reshape(K, C).astype(jnp.float32)                # (K, C)
  bc = conv_b.reshape(K).astype(jnp.float32)                   # (K,)
  w1r = lin1_w.reshape(OUT, K, HW).astype(jnp.float32)         # (OUT, K, HW)

  # W_eff[(c,p), o] = sum_k wc[k,c] * W1[o, k*HW + p]
  w_eff = jnp.einsum("kc,okp->cpo", wc, w1r).reshape(CHW, OUT)
  # b_eff[o] = b1[o] + sum_k bc[k] * sum_p W1[o, k*HW + p]
  b_eff = lin1_b.astype(jnp.float32) + jnp.einsum("k,okp->o", bc, w1r)

  w_pad = jnp.pad(w_eff, ((0, CHW_pad - CHW), (0, 0)))
  w_bf = w_pad.astype(jnp.bfloat16)

  aux = jnp.stack(
      [b_eff,
       lin2_w.reshape(OUT).astype(jnp.float32),
       jnp.broadcast_to(lin2_b.reshape(1).astype(jnp.float32), (OUT,))],
      axis=0)                                                  # (3, OUT) f32
  return w_bf, aux


@jax.jit
def value_head(x_nchw, w_bf, aux):
  """Per-call forward.  x_nchw: (B, C, H, W) f32.  Returns (B, 1) f32."""
  B, C, H, W = x_nchw.shape
  CHW = C * H * W
  CHW_pad, OUT = w_bf.shape

  # Only x-side layout work happens per call (tiny: B*CHW ~ 25 KB at B=2).
  x_flat = x_nchw.reshape(B, CHW).astype(jnp.bfloat16)
  x_pad = jnp.pad(x_flat, ((0, 0), (0, CHW_pad - CHW)))

  kernel = functools.partial(_value_head_kernel, neg_slope=0.01)
  vmem = pl.BlockSpec(memory_space=pltpu.MemorySpace.VMEM)
  cost = pl.CostEstimate(
      flops=2 * B * CHW_pad * OUT + 4 * B * OUT,
      transcendentals=B,
      bytes_accessed=(B * CHW_pad * 2       # x (bf16)
                      + CHW_pad * OUT * 2   # fused weight (bf16) -- dominant
                      + 3 * OUT * 4         # aux (f32)
                      + B * 4))             # out (f32)
  return pl.pallas_call(
      kernel,
      out_shape=jax.ShapeDtypeStruct((B, 1), jnp.float32),
      in_specs=[vmem, vmem, vmem],
      out_specs=vmem,
      cost_estimate=cost,
  )(x_pad, w_bf, aux)


def _reference(x_nchw, conv_w, conv_b, lin1_w, lin1_b, lin2_w, lin2_b):
  B, C, H, W = x_nchw.shape
  K = conv_w.shape[0]
  conv = jnp.einsum("kc,bchw->bkhw", conv_w.reshape(K, C), x_nchw)
  conv = conv + conv_b.reshape(1, K, 1, 1)
  flat = conv.reshape(B, K * H * W)
  h1 = flat @ lin1_w.T + lin1_b
  h1 = jnp.where(h1 > 0, h1, 0.01 * h1)
  h2 = h1 @ lin2_w.T + lin2_b
  return jnp.tanh(h2)


if __name__ == "__main__":
  # ValueHead(inp=75, hidden_size=420, out=256, kernels=10), input (B,75,7,6)
  B, C, H, W = 2, 75, 7, 6
  K, HID, OUT = 10, 420, 256
  assert HID == K * H * W

  key = jax.random.PRNGKey(0)
  ks = jax.random.split(key, 7)

  def u(k, shape, fan_in):
    bound = 1.0 / np.sqrt(fan_in)
    return jax.random.uniform(k, shape, jnp.float32, -bound, bound)

  x = jax.random.normal(ks[0], (B, C, H, W), jnp.float32)
  conv_w = u(ks[1], (K, C, 1, 1), C)        # Conv2d(75, 10, 1)
  conv_b = u(ks[2], (K,), C)
  lin1_w = u(ks[3], (OUT, HID), HID)        # Linear(420, 256)
  lin1_b = u(ks[4], (OUT,), HID)
  lin2_w = u(ks[5], (1, OUT), OUT)          # Linear(256, 1)
  lin2_b = u(ks[6], (1,), OUT)

  # One-time parameter fusion (outside the per-call path).
  w_bf, aux = prepare_value_head_params(conv_w, conv_b, lin1_w, lin1_b,
                                        lin2_w, lin2_b, H, W)
  w_bf, aux = jax.block_until_ready((w_bf, aux))

  out = value_head(x, w_bf, aux)
  out = jax.block_until_ready(out)

  ref = _reference(x, conv_w, conv_b, lin1_w, lin1_b, lin2_w, lin2_b)
  # bf16 matmul inputs (f32 accumulation) => relaxed tolerance vs f32 reference.
  np.testing.assert_allclose(np.asarray(out), np.asarray(ref),
                             rtol=2e-2, atol=2e-2)
  assert out.shape == (B, 1)
  print("KERNEL_OK")
</pallas_src>

<mosaic_0001>
module attributes {stable_mosaic.version = 11 : i64} {
  func.func @_value_head_kernel(%arg0: memref<2x3328xbf16, #tpu.memory_space<vmem>>, %arg1: memref<3328x256xbf16, #tpu.memory_space<vmem>>, %arg2: memref<3x256xf32, #tpu.memory_space<vmem>>, %arg3: memref<2x1xf32, #tpu.memory_space<vmem>>) attributes {dimension_semantics = [], scalar_prefetch = 0 : i64, scratch_operands = 0 : i64, tpu.core_type = #tpu.core_type<tc>} {
    %c0 = arith.constant 0 : index
    %c0_0 = arith.constant 0 : index
    %0 = vector.load %arg0[%c0, %c0_0] : memref<2x3328xbf16, #tpu.memory_space<vmem>>, vector<2x3328xbf16>
    %c0_1 = arith.constant 0 : index
    %c0_2 = arith.constant 0 : index
    %1 = vector.load %arg1[%c0_1, %c0_2] : memref<3328x256xbf16, #tpu.memory_space<vmem>>, vector<3328x256xbf16>
    %cst = arith.constant dense<0.000000e+00> : vector<2x256xf32>
    %2 = tpu.matmul %0, %1, %cst {dimension_numbers = #tpu.dot_dimension_numbers<[1], [0], [0], [1], [0, 0, 1, 1], [], []>} : vector<2x3328xbf16>, vector<3328x256xbf16>, vector<2x256xf32> -> vector<2x256xf32>
    %c0_3 = arith.constant 0 : index
    %c0_4 = arith.constant 0 : index
    %3 = vector.load %arg2[%c0_3, %c0_4] : memref<3x256xf32, #tpu.memory_space<vmem>>, vector<1x256xf32>
    %4 = vector.broadcast %3 : vector<1x256xf32> to vector<2x256xf32>
    %5 = arith.addf %2, %4 : vector<2x256xf32>
    %cst_5 = arith.constant 0.000000e+00 : f32
    %6 = vector.broadcast %cst_5 : f32 to vector<2x256xf32>
    %7 = arith.cmpf ogt, %5, %6 : vector<2x256xf32>
    %cst_6 = arith.constant 0.00999999977 : f32
    %8 = vector.broadcast %cst_6 : f32 to vector<2x256xf32>
    %9 = arith.mulf %8, %5 : vector<2x256xf32>
    %10 = arith.select %7, %5, %9 : vector<2x256xi1>, vector<2x256xf32>
    %c1 = arith.constant 1 : index
    %c0_7 = arith.constant 0 : index
    %11 = vector.load %arg2[%c1, %c0_7] : memref<3x256xf32, #tpu.memory_space<vmem>>, vector<1x256xf32>
    %12 = vector.broadcast %11 : vector<1x256xf32> to vector<2x256xf32>
    %13 = arith.mulf %10, %12 : vector<2x256xf32>
    %cst_8 = arith.constant dense<0.000000e+00> : vector<2xf32>
    %14 = vector.multi_reduction <add>, %13, %cst_8 [1] : vector<2x256xf32> to vector<2xf32>
    %15 = vector.shape_cast %14 : vector<2xf32> to vector<2x1xf32>
    %c2 = arith.constant 2 : index
    %c0_9 = arith.constant 0 : index
    %16 = vector.load %arg2[%c2, %c0_9] : memref<3x256xf32, #tpu.memory_space<vmem>>, vector<1x1xf32>
    %17 = vector.broadcast %16 : vector<1x1xf32> to vector<2x1xf32>
    %18 = arith.addf %15, %17 : vector<2x1xf32>
    %19 = math.tanh %18 : vector<2x1xf32>
    %c0_10 = arith.constant 0 : index
    %c0_11 = arith.constant 0 : index
    %20 = vector.load %arg3[%c0_10, %c0_11] : memref<2x1xf32, #tpu.memory_space<vmem>>, vector<2x1xf32>
    tpu.vector_store %arg3[%c0_10, %c0_11], %19 {strides = array<i32>} : memref<2x1xf32, #tpu.memory_space<vmem>>, vector<2x1xf32>,
    return
  }
}

</mosaic_0001>

<llo_original>
// kernel: value_head.1
$region0: #{value_head.1}
  #allocation0 [shape = 'u32[]', space=smem, size = 0x4, offset = 0x4, fixed_abs, tag = 'smem constant byte address 0x4 - core index']
  #allocation1 [shape = 'u32[144,128]{1,0:T(1,128)}', space=vmem, size = 0x12000, scoped, tag = 'internal scratch']
  %s0 = inlined_call_operand.vmem [shape: bf16[2,3328], index: 0, kind: input, shape index: {}]
  %s1 = inlined_call_operand.hbm [shape: bf16[3328,256], index: 1, kind: input, shape index: {}]
  %s2 = inlined_call_operand.hbm [shape: f32[3,256], index: 2, kind: input, shape index: {}]
  %s3 = inlined_call_operand.vmem [shape: f32[2,1], index: 3, kind: output, shape index: {}]
  %s4 = sld [smem:[#allocation0]]
  $region30: #{value_head.1} parent=0
    _
  %s6 = ssub.s32 1, %s4
  %s7 = scalar_select 0, %s6, %s4
  $region1: #{value_head.1} parent=0
    #allocation2 [shape = 'u8[1703936]{0}', space=vmem, size = 0x1a0000, scoped, tag = 'input window, operand 1, single buffered']
    #allocation3 [shape = 's32[1]{0}', space=sflag, size = 0x4, scoped, tag = 'scoped memory for value_head.1']
    #allocation4 [shape = 'u8[4096]{0}', space=vmem, size = 0x1000, scoped, tag = 'input window, operand 2, single buffered']
    #allocation5 [shape = 's32[1]{0}', space=sflag, size = 0x4, scoped, tag = 'scoped memory for value_head.1']
    %8 = vsyncpa [#allocation3], 0
    %9 = vsyncpa [#allocation5], 0
    // Predicated region
    $region2: #{value_head.1} parent=1 // pred_check
      _
    $region3: #{value_head.1} parent=1 // pred_check_branch
      %11 = sbr.rel (0) target = $region5
    $region4: #{value_head.1} parent=1 // pred_region
      _
    $region5: #{value_head.1} parent=1 // pred_fallthru
      _
    // Predicated region
    $region6: #{value_head.1} parent=1 // pred_check
      _
    $region7: #{value_head.1} parent=1 // pred_check_branch
      %13 = sbr.rel (0) target = $region9
    $region8: #{value_head.1} parent=1 // pred_region
      %s15 = ssub.s32 53248, 53248
      %16 = vsyncadd [#allocation3], %s15
      %s17 = sshll.u32 [#allocation2], 4
      %s18 = int_to_ptr.vmem [resolvable:$true] %s17
      %23 = dma.hbm_to_vmem [thread:$0]  %s1, 53248, %s18, [#allocation3], 128, 128, 8
    $region9: #{value_head.1} parent=1 // pred_fallthru
      _
    // Predicated region
    $region10: #{value_head.1} parent=1 // pred_check
      _
    $region11: #{value_head.1} parent=1 // pred_check_branch
      %25 = sbr.rel (0) target = $region13
    $region12: #{value_head.1} parent=1 // pred_region
      %s27 = ssub.s32 128, 128
      %28 = vsyncadd [#allocation5], %s27
      %s30 = sshll.u32 [#allocation4], 4
      %s31 = int_to_ptr.vmem [resolvable:$true] %s30
      %33 = dma.hbm_to_vmem [thread:$0]  %s2, 128, %s31, [#allocation5]
    $region13: #{value_head.1} parent=1 // pred_fallthru
      _
    // Predicated region
    $region14: #{value_head.1} parent=1 // pred_check
      _
    $region15: #{value_head.1} parent=1 // pred_check_branch
      %35 = sbr.rel (0) target = $region17
    $region16: #{value_head.1} parent=1 // pred_region
      %36 = dma.done [#allocation3], 53248
    $region17: #{value_head.1} parent=1 // pred_fallthru
      _
    // Predicated region
    $region18: #{value_head.1} parent=1 // pred_check
      _
    $region19: #{value_head.1} parent=1 // pred_check_branch
      %38 = sbr.rel (0) target = $region21
    $region20: #{value_head.1} parent=1 // pred_region
      %39 = dma.done [#allocation5], 128
    $region21: #{value_head.1} parent=1 // pred_fallthru
      _
    %v40 = vld [vmem:[%s0] sm:$0xff]
    %v41 = vld [vmem:[%s0 + $0x8] sm:$0xff]
    %v42 = vld [vmem:[%s0 + $0x10] sm:$0xff]
    %v43 = vld [vmem:[%s0 + $0x18] sm:$0x3]
    %v44 = vld [vmem:[#allocation2] sm:$0xff]
    %v45 = vld [vmem:[#allocation2 + $0x8] sm:$0xff]
    %v46 = vld [vmem:[#allocation2 + $0x10] sm:$0xff]
    %v47 = vld [vmem:[#allocation2 + $0x18] sm:$0xff]
    %v48 = vld [vmem:[#allocation2 + $0x20] sm:$0xff]
    %v49 = vld [vmem:[#allocation2 + $0x28] sm:$0xff]
    %v50 = vld [vmem:[#allocation2 + $0x30] sm:$0xff]
    %v51 = vld [vmem:[#allocation2 + $0x38] sm:$0xff]
    %v52 = vld [vmem:[#allocation2 + $0x40] sm:$0xff]
    %v53 = vld [vmem:[#allocation2 + $0x48] sm:$0xff]
    %v54 = vld [vmem:[#allocation2 + $0x50] sm:$0xff]
    %v55 = vld [vmem:[#allocation2 + $0x58] sm:$0xff]
    %v56 = vld [vmem:[#allocation2 + $0x60] sm:$0xff]
    %v57 = vld [vmem:[#allocation2 + $0x68] sm:$0xff]
    %v58 = vld [vmem:[#allocation2 + $0x70] sm:$0xff]
    %v59 = vld [vmem:[#allocation2 + $0x78] sm:$0xff]
    %v60 = vld [vmem:[#allocation2 + $0x80] sm:$0xff]
    %v61 = vld [vmem:[#allocation2 + $0x88] sm:$0xff]
    %v62 = vld [vmem:[#allocation2 + $0x90] sm:$0xff]
    %v63 = vld [vmem:[#allocation2 + $0x98] sm:$0xff]
    %v64 = vld [vmem:[#allocation2 + $0xa0] sm:$0xff]
    %v65 = vld [vmem:[#allocation2 + $0xa8] sm:$0xff]
    %v66 = vld [vmem:[#allocation2 + $0xb0] sm:$0xff]
    %v67 = vld [vmem:[#allocation2 + $0xb8] sm:$0xff]
    %v68 = vld [vmem:[#allocation2 + $0xc0] sm:$0xff]
    %v69 = vld [vmem:[#allocation2 + $0xc8] sm:$0xff]
    %v70 = vld [vmem:[#allocation2 + $0xd0] sm:$0xff]
    %v71 = vld [vmem:[#allocation2 + $0xd8] sm:$0xff]
    %v72 = vld [vmem:[#allocation2 + $0xe0] sm:$0xff]
    %v73 = vld [vmem:[#allocation2 + $0xe8] sm:$0xff]
    %v74 = vld [vmem:[#allocation2 + $0xf0] sm:$0xff]
    %v75 = vld [vmem:[#allocation2 + $0xf8] sm:$0xff]
    %v76 = vld [vmem:[#allocation2 + $0x100] sm:$0xff]
    %v77 = vld [vmem:[#allocation2 + $0x108] sm:$0xff]
    %v78 = vld [vmem:[#allocation2 + $0x110] sm:$0xff]
    %v79 = vld [vmem:[#allocation2 + $0x118] sm:$0xff]
    %v80 = vld [vmem:[#allocation2 + $0x120] sm:$0xff]
    %v81 = vld [vmem:[#allocation2 + $0x128] sm:$0xff]
    %v82 = vld [vmem:[#allocation2 + $0x130] sm:$0xff]
    %v83 = vld [vmem:[#allocation2 + $0x138] sm:$0xff]
    %v84 = vld [vmem:[#allocation2 + $0x140] sm:$0xff]
    %v85 = vld [vmem:[#allocation2 + $0x148] sm:$0xff]
    %v86 = vld [vmem:[#allocation2 + $0x150] sm:$0xff]
    %v87 = vld [vmem:[#allocation2 + $0x158] sm:$0xff]
    %v88 = vld [vmem:[#allocation2 + $0x160] sm:$0xff]
    %v89 = vld [vmem:[#allocation2 + $0x168] sm:$0xff]
    %v90 = vld [vmem:[#allocation2 + $0x170] sm:$0xff]
    %v91 = vld [vmem:[#allocation2 + $0x178] sm:$0xff]
    %v92 = vld [vmem:[#allocation2 + $0x180] sm:$0xff]
    %v93 = vld [vmem:[#allocation2 + $0x188] sm:$0xff]
    %v94 = vld [vmem:[#allocation2 + $0x190] sm:$0xff]
    %v95 = vld [vmem:[#allocation2 + $0x198] sm:$0xff]
    %v96 = vld [vmem:[#allocation2 + $0x1a0] sm:$0xff]
    %v97 = vld [vmem:[#allocation2 + $0x1a8] sm:$0xff]
    %v98 = vld [vmem:[#allocation2 + $0x1b0] sm:$0xff]
    %v99 = vld [vmem:[#allocation2 + $0x1b8] sm:$0xff]
    %v100 = vld [vmem:[#allocation2 + $0x1c0] sm:$0xff]
    %v101 = vld [vmem:[#allocation2 + $0x1c8] sm:$0xff]
    %v102 = vld [vmem:[#allocation2 + $0x1d0] sm:$0xff]
    %v103 = vld [vmem:[#allocation2 + $0x1d8] sm:$0xff]
    %v104 = vld [vmem:[#allocation2 + $0x1e0] sm:$0xff]
    %v105 = vld [vmem:[#allocation2 + $0x1e8] sm:$0xff]
    %v106 = vld [vmem:[#allocation2 + $0x1f0] sm:$0xff]
    %v107 = vld [vmem:[#allocation2 + $0x1f8] sm:$0xff]
    %v108 = vld [vmem:[#allocation2 + $0x200] sm:$0xff]
    %v109 = vld [vmem:[#allocation2 + $0x208] sm:$0xff]
    %v110 = vld [vmem:[#allocation2 + $0x210] sm:$0xff]
    %v111 = vld [vmem:[#allocation2 + $0x218] sm:$0xff]
    %v112 = vld [vmem:[#allocation2 + $0x220] sm:$0xff]
    %v113 = vld [vmem:[#allocation2 + $0x228] sm:$0xff]
    %v114 = vld [vmem:[#allocation2 + $0x230] sm:$0xff]
    %v115 = vld [vmem:[#allocation2 + $0x238] sm:$0xff]
    %v116 = vld [vmem:[#allocation2 + $0x240] sm:$0xff]
    %v117 = vld [vmem:[#allocation2 + $0x248] sm:$0xff]
    %v118 = vld [vmem:[#allocation2 + $0x250] sm:$0xff]
    %v119 = vld [vmem:[#allocation2 + $0x258] sm:$0xff]
    %v120 = vld [vmem:[#allocation2 + $0x260] sm:$0xff]
    %v121 = vld [vmem:[#allocation2 + $0x268] sm:$0xff]
    %v122 = vld [vmem:[#allocation2 + $0x270] sm:$0xff]
    %v123 = vld [vmem:[#allocation2 + $0x278] sm:$0xff]
    %v124 = vld [vmem:[#allocation2 + $0x280] sm:$0xff]
    %v125 = vld [vmem:[#allocation2 + $0x288] sm:$0xff]
    %v126 = vld [vmem:[#allocation2 + $0x290] sm:$0xff]
    %v127 = vld [vmem:[#allocation2 + $0x298] sm:$0xff]
    %v128 = vld [vmem:[#allocation2 + $0x2a0] sm:$0xff]
    %v129 = vld [vmem:[#allocation2 + $0x2a8] sm:$0xff]
    %v130 = vld [vmem:[#allocation2 + $0x2b0] sm:$0xff]
    %v131 = vld [vmem:[#allocation2 + $0x2b8] sm:$0xff]
    %v132 = vld [vmem:[#allocation2 + $0x2c0] sm:$0xff]
    %v133 = vld [vmem:[#allocation2 + $0x2c8] sm:$0xff]
    %v134 = vld [vmem:[#allocation2 + $0x2d0] sm:$0xff]
    %v135 = vld [vmem:[#allocation2 + $0x2d8] sm:$0xff]
    %v136 = vld [vmem:[#allocation2 + $0x2e0] sm:$0xff]
    %v137 = vld [vmem:[#allocation2 + $0x2e8] sm:$0xff]
    %v138 = vld [vmem:[#allocation2 + $0x2f0] sm:$0xff]
    %v139 = vld [vmem:[#allocation2 + $0x2f8] sm:$0xff]
    %v140 = vld [vmem:[#allocation2 + $0x300] sm:$0xff]
    %v141 = vld [vmem:[#allocation2 + $0x308] sm:$0xff]
    %v142 = vld [vmem:[#allocation2 + $0x310] sm:$0xff]
    %v143 = vld [vmem:[#allocation2 + $0x318] sm:$0xff]
    %v144 = vld [vmem:[#allocation2 + $0x320] sm:$0xff]
    %v145 = vld [vmem:[#allocation2 + $0x328] sm:$0xff]
    %v146 = vld [vmem:[#allocation2 + $0x330] sm:$0xff]
    %v147 = vld [vmem:[#allocation2 + $0x338] sm:$0xff]
    %v148 = vld [vmem:[#allocation2 + $0x340] sm:$0xff]
    %v149 = vld [vmem:[#allocation2 + $0x348] sm:$0xff]
    %v150 = vld [vmem:[#allocation2 + $0x350] sm:$0xff]
    %v151 = vld [vmem:[#allocation2 + $0x358] sm:$0xff]
    %v152 = vld [vmem:[#allocation2 + $0x360] sm:$0xff]
    %v153 = vld [vmem:[#allocation2 + $0x368] sm:$0xff]
    %v154 = vld [vmem:[#allocation2 + $0x370] sm:$0xff]
    %v155 = vld [vmem:[#allocation2 + $0x378] sm:$0xff]
    %v156 = vld [vmem:[#allocation2 + $0x380] sm:$0xff]
    %v157 = vld [vmem:[#allocation2 + $0x388] sm:$0xff]
    %v158 = vld [vmem:[#allocation2 + $0x390] sm:$0xff]
    %v159 = vld [vmem:[#allocation2 + $0x398] sm:$0xff]
    %v160 = vld [vmem:[#allocation2 + $0x3a0] sm:$0xff]
    %v161 = vld [vmem:[#allocation2 + $0x3a8] sm:$0xff]
    %v162 = vld [vmem:[#allocation2 + $0x3b0] sm:$0xff]
    %v163 = vld [vmem:[#allocation2 + $0x3b8] sm:$0xff]
    %v164 = vld [vmem:[#allocation2 + $0x3c0] sm:$0xff]
    %v165 = vld [vmem:[#allocation2 + $0x3c8] sm:$0xff]
    %v166 = vld [vmem:[#allocation2 + $0x3d0] sm:$0xff]
    %v167 = vld [vmem:[#allocation2 + $0x3d8] sm:$0xff]
    %v168 = vld [vmem:[#allocation2 + $0x3e0] sm:$0xff]
    %v169 = vld [vmem:[#allocation2 + $0x3e8] sm:$0xff]
    %v170 = vld [vmem:[#allocation2 + $0x3f0] sm:$0xff]
    %v171 = vld [vmem:[#allocation2 + $0x3f8] sm:$0xff]
    %v172 = vld [vmem:[#allocation2 + $0x400] sm:$0xff]
    %v173 = vld [vmem:[#allocation2 + $0x408] sm:$0xff]
    %v174 = vld [vmem:[#allocation2 + $0x410] sm:$0xff]
    %v175 = vld [vmem:[#allocation2 + $0x418] sm:$0xff]
    %v176 = vld [vmem:[#allocation2 + $0x420] sm:$0xff]
    %v177 = vld [vmem:[#allocation2 + $0x428] sm:$0xff]
    %v178 = vld [vmem:[#allocation2 + $0x430] sm:$0xff]
    %v179 = vld [vmem:[#allocation2 + $0x438] sm:$0xff]
    %v180 = vld [vmem:[#allocation2 + $0x440] sm:$0xff]
    %v181 = vld [vmem:[#allocation2 + $0x448] sm:$0xff]
    %v182 = vld [vmem:[#allocation2 + $0x450] sm:$0xff]
    %v183 = vld [vmem:[#allocation2 + $0x458] sm:$0xff]
    %v184 = vld [vmem:[#allocation2 + $0x460] sm:$0xff]
    %v185 = vld [vmem:[#allocation2 + $0x468] sm:$0xff]
    %v186 = vld [vmem:[#allocation2 + $0x470] sm:$0xff]
    %v187 = vld [vmem:[#allocation2 + $0x478] sm:$0xff]
    %v188 = vld [vmem:[#allocation2 + $0x480] sm:$0xff]
    %v189 = vld [vmem:[#allocation2 + $0x488] sm:$0xff]
    %v190 = vld [vmem:[#allocation2 + $0x490] sm:$0xff]
    %v191 = vld [vmem:[#allocation2 + $0x498] sm:$0xff]
    %v192 = vld [vmem:[#allocation2 + $0x4a0] sm:$0xff]
    %v193 = vld [vmem:[#allocation2 + $0x4a8] sm:$0xff]
    %v194 = vld [vmem:[#allocation2 + $0x4b0] sm:$0xff]
    %v195 = vld [vmem:[#allocation2 + $0x4b8] sm:$0xff]
    %v196 = vld [vmem:[#allocation2 + $0x4c0] sm:$0xff]
    %v197 = vld [vmem:[#allocation2 + $0x4c8] sm:$0xff]
    %v198 = vld [vmem:[#allocation2 + $0x4d0] sm:$0xff]
    %v199 = vld [vmem:[#allocation2 + $0x4d8] sm:$0xff]
    %v200 = vld [vmem:[#allocation2 + $0x4e0] sm:$0xff]
    %v201 = vld [vmem:[#allocation2 + $0x4e8] sm:$0xff]
    %v202 = vld [vmem:[#allocation2 + $0x4f0] sm:$0xff]
    %v203 = vld [vmem:[#allocation2 + $0x4f8] sm:$0xff]
    %v204 = vld [vmem:[#allocation2 + $0x500] sm:$0xff]
    %v205 = vld [vmem:[#allocation2 + $0x508] sm:$0xff]
    %v206 = vld [vmem:[#allocation2 + $0x510] sm:$0xff]
    %v207 = vld [vmem:[#allocation2 + $0x518] sm:$0xff]
    %v208 = vld [vmem:[#allocation2 + $0x520] sm:$0xff]
    %v209 = vld [vmem:[#allocation2 + $0x528] sm:$0xff]
    %v210 = vld [vmem:[#allocation2 + $0x530] sm:$0xff]
    %v211 = vld [vmem:[#allocation2 + $0x538] sm:$0xff]
    %v212 = vld [vmem:[#allocation2 + $0x540] sm:$0xff]
    %v213 = vld [vmem:[#allocation2 + $0x548] sm:$0xff]
    %v214 = vld [vmem:[#allocation2 + $0x550] sm:$0xff]
    %v215 = vld [vmem:[#allocation2 + $0x558] sm:$0xff]
    %v216 = vld [vmem:[#allocation2 + $0x560] sm:$0xff]
    %v217 = vld [vmem:[#allocation2 + $0x568] sm:$0xff]
    %v218 = vld [vmem:[#allocation2 + $0x570] sm:$0xff]
    %v219 = vld [vmem:[#allocation2 + $0x578] sm:$0xff]
    %v220 = vld [vmem:[#allocation2 + $0x580] sm:$0xff]
    %v221 = vld [vmem:[#allocation2 + $0x588] sm:$0xff]
    %v222 = vld [vmem:[#allocation2 + $0x590] sm:$0xff]
    %v223 = vld [vmem:[#allocation2 + $0x598] sm:$0xff]
    %v224 = vld [vmem:[#allocation2 + $0x5a0] sm:$0xff]
    %v225 = vld [vmem:[#allocation2 + $0x5a8] sm:$0xff]
    %v226 = vld [vmem:[#allocation2 + $0x5b0] sm:$0xff]
    %v227 = vld [vmem:[#allocation2 + $0x5b8] sm:$0xff]
    %v228 = vld [vmem:[#allocation2 + $0x5c0] sm:$0xff]
    %v229 = vld [vmem:[#allocation2 + $0x5c8] sm:$0xff]
    %v230 = vld [vmem:[#allocation2 + $0x5d0] sm:$0xff]
    %v231 = vld [vmem:[#allocation2 + $0x5d8] sm:$0xff]
    %v232 = vld [vmem:[#allocation2 + $0x5e0] sm:$0xff]
    %v233 = vld [vmem:[#allocation2 + $0x5e8] sm:$0xff]
    %v234 = vld [vmem:[#allocation2 + $0x5f0] sm:$0xff]
    %v235 = vld [vmem:[#allocation2 + $0x5f8] sm:$0xff]
    %v236 = vld [vmem:[#allocation2 + $0x600] sm:$0xff]
    %v237 = vld [vmem:[#allocation2 + $0x608] sm:$0xff]
    %v238 = vld [vmem:[#allocation2 + $0x610] sm:$0xff]
    %v239 = vld [vmem:[#allocation2 + $0x618] sm:$0xff]
    %v240 = vld [vmem:[#allocation2 + $0x620] sm:$0xff]
    %v241 = vld [vmem:[#allocation2 + $0x628] sm:$0xff]
    %v242 = vld [vmem:[#allocation2 + $0x630] sm:$0xff]
    %v243 = vld [vmem:[#allocation2 + $0x638] sm:$0xff]
    %v244 = vld [vmem:[#allocation2 + $0x640] sm:$0xff]
    %v245 = vld [vmem:[#allocation2 + $0x648] sm:$0xff]
    %v246 = vld [vmem:[#allocation2 + $0x650] sm:$0xff]
    %v247 = vld [vmem:[#allocation2 + $0x658] sm:$0xff]
    %v248 = vld [vmem:[#allocation2 + $0x660] sm:$0xff]
    %v249 = vld [vmem:[#allocation2 + $0x668] sm:$0xff]
    %v250 = vld [vmem:[#allocation2 + $0x670] sm:$0xff]
    %v251 = vld [vmem:[#allocation2 + $0x678] sm:$0xff]
    %v252 = vld [vmem:[#allocation2 + $0x680] sm:$0xff]
    %v253 = vld [vmem:[#allocation2 + $0x688] sm:$0xff]
    %v254 = vld [vmem:[#allocation2 + $0x690] sm:$0xff]
    %v255 = vld [vmem:[#allocation2 + $0x698] sm:$0xff]
    %v256 = vld [vmem:[#allocation2 + $0x6a0] sm:$0xff]
    %v257 = vld [vmem:[#allocation2 + $0x6a8] sm:$0xff]
    %v258 = vld [vmem:[#allocation2 + $0x6b0] sm:$0xff]
    %v259 = vld [vmem:[#allocation2 + $0x6b8] sm:$0xff]
    %v260 = vld [vmem:[#allocation2 + $0x6c0] sm:$0xff]
    %v261 = vld [vmem:[#allocation2 + $0x6c8] sm:$0xff]
    %v262 = vld [vmem:[#allocation2 + $0x6d0] sm:$0xff]
    %v263 = vld [vmem:[#allocation2 + $0x6d8] sm:$0xff]
    %v264 = vld [vmem:[#allocation2 + $0x6e0] sm:$0xff]
    %v265 = vld [vmem:[#allocation2 + $0x6e8] sm:$0xff]
    %v266 = vld [vmem:[#allocation2 + $0x6f0] sm:$0xff]
    %v267 = vld [vmem:[#allocation2 + $0x6f8] sm:$0xff]
    %v268 = vld [vmem:[#allocation2 + $0x700] sm:$0xff]
    %v269 = vld [vmem:[#allocation2 + $0x708] sm:$0xff]
    %v270 = vld [vmem:[#allocation2 + $0x710] sm:$0xff]
    %v271 = vld [vmem:[#allocation2 + $0x718] sm:$0xff]
    %v272 = vld [vmem:[#allocation2 + $0x720] sm:$0xff]
    %v273 = vld [vmem:[#allocation2 + $0x728] sm:$0xff]
    %v274 = vld [vmem:[#allocation2 + $0x730] sm:$0xff]
    %v275 = vld [vmem:[#allocation2 + $0x738] sm:$0xff]
    %v276 = vld [vmem:[#allocation2 + $0x740] sm:$0xff]
    %v277 = vld [vmem:[#allocation2 + $0x748] sm:$0xff]
    %v278 = vld [vmem:[#allocation2 + $0x750] sm:$0xff]
    %v279 = vld [vmem:[#allocation2 + $0x758] sm:$0xff]
    %v280 = vld [vmem:[#allocation2 + $0x760] sm:$0xff]
    %v281 = vld [vmem:[#allocation2 + $0x768] sm:$0xff]
    %v282 = vld [vmem:[#allocation2 + $0x770] sm:$0xff]
    %v283 = vld [vmem:[#allocation2 + $0x778] sm:$0xff]
    %v284 = vld [vmem:[#allocation2 + $0x780] sm:$0xff]
    %v285 = vld [vmem:[#allocation2 + $0x788] sm:$0xff]
    %v286 = vld [vmem:[#allocation2 + $0x790] sm:$0xff]
    %v287 = vld [vmem:[#allocation2 + $0x798] sm:$0xff]
    %v288 = vld [vmem:[#allocation2 + $0x7a0] sm:$0xff]
    %v289 = vld [vmem:[#allocation2 + $0x7a8] sm:$0xff]
    %v290 = vld [vmem:[#allocation2 + $0x7b0] sm:$0xff]
    %v291 = vld [vmem:[#allocation2 + $0x7b8] sm:$0xff]
    %v292 = vld [vmem:[#allocation2 + $0x7c0] sm:$0xff]
    %v293 = vld [vmem:[#allocation2 + $0x7c8] sm:$0xff]
    %v294 = vld [vmem:[#allocation2 + $0x7d0] sm:$0xff]
    %v295 = vld [vmem:[#allocation2 + $0x7d8] sm:$0xff]
    %v296 = vld [vmem:[#allocation2 + $0x7e0] sm:$0xff]
    %v297 = vld [vmem:[#allocation2 + $0x7e8] sm:$0xff]
    %v298 = vld [vmem:[#allocation2 + $0x7f0] sm:$0xff]
    %v299 = vld [vmem:[#allocation2 + $0x7f8] sm:$0xff]
    %v300 = vld [vmem:[#allocation2 + $0x800] sm:$0xff]
    %v301 = vld [vmem:[#allocation2 + $0x808] sm:$0xff]
    %v302 = vld [vmem:[#allocation2 + $0x810] sm:$0xff]
    %v303 = vld [vmem:[#allocation2 + $0x818] sm:$0xff]
    %v304 = vld [vmem:[#allocation2 + $0x820] sm:$0xff]
    %v305 = vld [vmem:[#allocation2 + $0x828] sm:$0xff]
    %v306 = vld [vmem:[#allocation2 + $0x830] sm:$0xff]
    %v307 = vld [vmem:[#allocation2 + $0x838] sm:$0xff]
    %v308 = vld [vmem:[#allocation2 + $0x840] sm:$0xff]
    %v309 = vld [vmem:[#allocation2 + $0x848] sm:$0xff]
    %v310 = vld [vmem:[#allocation2 + $0x850] sm:$0xff]
    %v311 = vld [vmem:[#allocation2 + $0x858] sm:$0xff]
    %v312 = vld [vmem:[#allocation2 + $0x860] sm:$0xff]
    %v313 = vld [vmem:[#allocation2 + $0x868] sm:$0xff]
    %v314 = vld [vmem:[#allocation2 + $0x870] sm:$0xff]
    %v315 = vld [vmem:[#allocation2 + $0x878] sm:$0xff]
    %v316 = vld [vmem:[#allocation2 + $0x880] sm:$0xff]
    %v317 = vld [vmem:[#allocation2 + $0x888] sm:$0xff]
    %v318 = vld [vmem:[#allocation2 + $0x890] sm:$0xff]
    %v319 = vld [vmem:[#allocation2 + $0x898] sm:$0xff]
    %v320 = vld [vmem:[#allocation2 + $0x8a0] sm:$0xff]
    %v321 = vld [vmem:[#allocation2 + $0x8a8] sm:$0xff]
    %v322 = vld [vmem:[#allocation2 + $0x8b0] sm:$0xff]
    %v323 = vld [vmem:[#allocation2 + $0x8b8] sm:$0xff]
    %v324 = vld [vmem:[#allocation2 + $0x8c0] sm:$0xff]
    %v325 = vld [vmem:[#allocation2 + $0x8c8] sm:$0xff]
    %v326 = vld [vmem:[#allocation2 + $0x8d0] sm:$0xff]
    %v327 = vld [vmem:[#allocation2 + $0x8d8] sm:$0xff]
    %v328 = vld [vmem:[#allocation2 + $0x8e0] sm:$0xff]
    %v329 = vld [vmem:[#allocation2 + $0x8e8] sm:$0xff]
    %v330 = vld [vmem:[#allocation2 + $0x8f0] sm:$0xff]
    %v331 = vld [vmem:[#allocation2 + $0x8f8] sm:$0xff]
    %v332 = vld [vmem:[#allocation2 + $0x900] sm:$0xff]
    %v333 = vld [vmem:[#allocation2 + $0x908] sm:$0xff]
    %v334 = vld [vmem:[#allocation2 + $0x910] sm:$0xff]
    %v335 = vld [vmem:[#allocation2 + $0x918] sm:$0xff]
    %v336 = vld [vmem:[#allocation2 + $0x920] sm:$0xff]
    %v337 = vld [vmem:[#allocation2 + $0x928] sm:$0xff]
    %v338 = vld [vmem:[#allocation2 + $0x930] sm:$0xff]
    %v339 = vld [vmem:[#allocation2 + $0x938] sm:$0xff]
    %v340 = vld [vmem:[#allocation2 + $0x940] sm:$0xff]
    %v341 = vld [vmem:[#allocation2 + $0x948] sm:$0xff]
    %v342 = vld [vmem:[#allocation2 + $0x950] sm:$0xff]
    %v343 = vld [vmem:[#allocation2 + $0x958] sm:$0xff]
    %v344 = vld [vmem:[#allocation2 + $0x960] sm:$0xff]
    %v345 = vld [vmem:[#allocation2 + $0x968] sm:$0xff]
    %v346 = vld [vmem:[#allocation2 + $0x970] sm:$0xff]
    %v347 = vld [vmem:[#allocation2 + $0x978] sm:$0xff]
    %v348 = vld [vmem:[#allocation2 + $0x980] sm:$0xff]
    %v349 = vld [vmem:[#allocation2 + $0x988] sm:$0xff]
    %v350 = vld [vmem:[#allocation2 + $0x990] sm:$0xff]
    %v351 = vld [vmem:[#allocation2 + $0x998] sm:$0xff]
    %v352 = vld [vmem:[#allocation2 + $0x9a0] sm:$0xff]
    %v353 = vld [vmem:[#allocation2 + $0x9a8] sm:$0xff]
    %v354 = vld [vmem:[#allocation2 + $0x9b0] sm:$0xff]
    %v355 = vld [vmem:[#allocation2 + $0x9b8] sm:$0xff]
    %v356 = vld [vmem:[#allocation2 + $0x9c0] sm:$0xff]
    %v357 = vld [vmem:[#allocation2 + $0x9c8] sm:$0xff]
    %v358 = vld [vmem:[#allocation2 + $0x9d0] sm:$0xff]
    %v359 = vld [vmem:[#allocation2 + $0x9d8] sm:$0xff]
    %v360 = vld [vmem:[#allocation2 + $0x9e0] sm:$0xff]
    %v361 = vld [vmem:[#allocation2 + $0x9e8] sm:$0xff]
    %v362 = vld [vmem:[#allocation2 + $0x9f0] sm:$0xff]
    %v363 = vld [vmem:[#allocation2 + $0x9f8] sm:$0xff]
    %v364 = vld [vmem:[#allocation2 + $0xa00] sm:$0xff]
    %v365 = vld [vmem:[#allocation2 + $0xa08] sm:$0xff]
    %v366 = vld [vmem:[#allocation2 + $0xa10] sm:$0xff]
    %v367 = vld [vmem:[#allocation2 + $0xa18] sm:$0xff]
    %v368 = vld [vmem:[#allocation2 + $0xa20] sm:$0xff]
    %v369 = vld [vmem:[#allocation2 + $0xa28] sm:$0xff]
    %v370 = vld [vmem:[#allocation2 + $0xa30] sm:$0xff]
    %v371 = vld [vmem:[#allocation2 + $0xa38] sm:$0xff]
    %v372 = vld [vmem:[#allocation2 + $0xa40] sm:$0xff]
    %v373 = vld [vmem:[#allocation2 + $0xa48] sm:$0xff]
    %v374 = vld [vmem:[#allocation2 + $0xa50] sm:$0xff]
    %v375 = vld [vmem:[#allocation2 + $0xa58] sm:$0xff]
    %v376 = vld [vmem:[#allocation2 + $0xa60] sm:$0xff]
    %v377 = vld [vmem:[#allocation2 + $0xa68] sm:$0xff]
    %v378 = vld [vmem:[#allocation2 + $0xa70] sm:$0xff]
    %v379 = vld [vmem:[#allocation2 + $0xa78] sm:$0xff]
    %v380 = vld [vmem:[#allocation2 + $0xa80] sm:$0xff]
    %v381 = vld [vmem:[#allocation2 + $0xa88] sm:$0xff]
    %v382 = vld [vmem:[#allocation2 + $0xa90] sm:$0xff]
    %v383 = vld [vmem:[#allocation2 + $0xa98] sm:$0xff]
    %v384 = vld [vmem:[#allocation2 + $0xaa0] sm:$0xff]
    %v385 = vld [vmem:[#allocation2 + $0xaa8] sm:$0xff]
    %v386 = vld [vmem:[#allocation2 + $0xab0] sm:$0xff]
    %v387 = vld [vmem:[#allocation2 + $0xab8] sm:$0xff]
    %v388 = vld [vmem:[#allocation2 + $0xac0] sm:$0xff]
    %v389 = vld [vmem:[#allocation2 + $0xac8] sm:$0xff]
    %v390 = vld [vmem:[#allocation2 + $0xad0] sm:$0xff]
    %v391 = vld [vmem:[#allocation2 + $0xad8] sm:$0xff]
    %v392 = vld [vmem:[#allocation2 + $0xae0] sm:$0xff]
    %v393 = vld [vmem:[#allocation2 + $0xae8] sm:$0xff]
    %v394 = vld [vmem:[#allocation2 + $0xaf0] sm:$0xff]
    %v395 = vld [vmem:[#allocation2 + $0xaf8] sm:$0xff]
    %v396 = vld [vmem:[#allocation2 + $0xb00] sm:$0xff]
    %v397 = vld [vmem:[#allocation2 + $0xb08] sm:$0xff]
    %v398 = vld [vmem:[#allocation2 + $0xb10] sm:$0xff]
    %v399 = vld [vmem:[#allocation2 + $0xb18] sm:$0xff]
    %v400 = vld [vmem:[#allocation2 + $0xb20] sm:$0xff]
    %v401 = vld [vmem:[#allocation2 + $0xb28] sm:$0xff]
    %v402 = vld [vmem:[#allocation2 + $0xb30] sm:$0xff]
    %v403 = vld [vmem:[#allocation2 + $0xb38] sm:$0xff]
    %v404 = vld [vmem:[#allocation2 + $0xb40] sm:$0xff]
    %v405 = vld [vmem:[#allocation2 + $0xb48] sm:$0xff]
    %v406 = vld [vmem:[#allocation2 + $0xb50] sm:$0xff]
    %v407 = vld [vmem:[#allocation2 + $0xb58] sm:$0xff]
    %v408 = vld [vmem:[#allocation2 + $0xb60] sm:$0xff]
    %v409 = vld [vmem:[#allocation2 + $0xb68] sm:$0xff]
    %v410 = vld [vmem:[#allocation2 + $0xb70] sm:$0xff]
    %v411 = vld [vmem:[#allocation2 + $0xb78] sm:$0xff]
    %v412 = vld [vmem:[#allocation2 + $0xb80] sm:$0xff]
    %v413 = vld [vmem:[#allocation2 + $0xb88] sm:$0xff]
    %v414 = vld [vmem:[#allocation2 + $0xb90] sm:$0xff]
    %v415 = vld [vmem:[#allocation2 + $0xb98] sm:$0xff]
    %v416 = vld [vmem:[#allocation2 + $0xba0] sm:$0xff]
    %v417 = vld [vmem:[#allocation2 + $0xba8] sm:$0xff]
    %v418 = vld [vmem:[#allocation2 + $0xbb0] sm:$0xff]
    %v419 = vld [vmem:[#allocation2 + $0xbb8] sm:$0xff]
    %v420 = vld [vmem:[#allocation2 + $0xbc0] sm:$0xff]
    %v421 = vld [vmem:[#allocation2 + $0xbc8] sm:$0xff]
    %v422 = vld [vmem:[#allocation2 + $0xbd0] sm:$0xff]
    %v423 = vld [vmem:[#allocation2 + $0xbd8] sm:$0xff]
    %v424 = vld [vmem:[#allocation2 + $0xbe0] sm:$0xff]
    %v425 = vld [vmem:[#allocation2 + $0xbe8] sm:$0xff]
    %v426 = vld [vmem:[#allocation2 + $0xbf0] sm:$0xff]
    %v427 = vld [vmem:[#allocation2 + $0xbf8] sm:$0xff]
    %v428 = vld [vmem:[#allocation2 + $0xc00] sm:$0xff]
    %v429 = vld [vmem:[#allocation2 + $0xc08] sm:$0xff]
    %v430 = vld [vmem:[#allocation2 + $0xc10] sm:$0xff]
    %v431 = vld [vmem:[#allocation2 + $0xc18] sm:$0xff]
    %v432 = vld [vmem:[#allocation2 + $0xc20] sm:$0xff]
    %v433 = vld [vmem:[#allocation2 + $0xc28] sm:$0xff]
    %v434 = vld [vmem:[#allocation2 + $0xc30] sm:$0xff]
    %v435 = vld [vmem:[#allocation2 + $0xc38] sm:$0xff]
    %v436 = vld [vmem:[#allocation2 + $0xc40] sm:$0xff]
    %v437 = vld [vmem:[#allocation2 + $0xc48] sm:$0xff]
    %v438 = vld [vmem:[#allocation2 + $0xc50] sm:$0xff]
    %v439 = vld [vmem:[#allocation2 + $0xc58] sm:$0xff]
    %v440 = vld [vmem:[#allocation2 + $0xc60] sm:$0xff]
    %v441 = vld [vmem:[#allocation2 + $0xc68] sm:$0xff]
    %v442 = vld [vmem:[#allocation2 + $0xc70] sm:$0xff]
    %v443 = vld [vmem:[#allocation2 + $0xc78] sm:$0xff]
    %v444 = vld [vmem:[#allocation2 + $0xc80] sm:$0xff]
    %v445 = vld [vmem:[#allocation2 + $0xc88] sm:$0xff]
    %v446 = vld [vmem:[#allocation2 + $0xc90] sm:$0xff]
    %v447 = vld [vmem:[#allocation2 + $0xc98] sm:$0xff]
    %v448 = vld [vmem:[#allocation2 + $0xca0] sm:$0xff]
    %v449 = vld [vmem:[#allocation2 + $0xca8] sm:$0xff]
    %v450 = vld [vmem:[#allocation2 + $0xcb0] sm:$0xff]
    %v451 = vld [vmem:[#allocation2 + $0xcb8] sm:$0xff]
    %v452 = vld [vmem:[#allocation2 + $0xcc0] sm:$0xff]
    %v453 = vld [vmem:[#allocation2 + $0xcc8] sm:$0xff]
    %v454 = vld [vmem:[#allocation2 + $0xcd0] sm:$0xff]
    %v455 = vld [vmem:[#allocation2 + $0xcd8] sm:$0xff]
    %v456 = vld [vmem:[#allocation2 + $0xce0] sm:$0xff]
    %v457 = vld [vmem:[#allocation2 + $0xce8] sm:$0xff]
    %v458 = vld [vmem:[#allocation2 + $0xcf0] sm:$0xff]
    %v459 = vld [vmem:[#allocation2 + $0xcf8] sm:$0xff]
    %v460 = vld [vmem:[#allocation4] ss:$4 sm:$0x3]
    %v462 = vlaneseq
    %v463 = vshrl.u32 %v462, 7
    %v464 = vsub.s32 0, %v463
    %v465 = vrot.slane %v460, %v464
    %v466 = vlaneseq
    %v467 = vshrl.u32 %v466, 7
    %v468 = vsub.s32 1, %v467
    %v469 = vrot.slane %v460, %v468
    %v476 = vcombine.high %v40, %v40
    %v478 = vunpack.c.l.s4 1966171168
    %v479 = vunpack.c.0.s8 %v478
    %v480 = vlaneseq
    %v481 = vshrl.u32 %v480, 7
    %v482 = vsub.s32 %v479, %v481
    %v483 = vrot.slane %v40, %v482
    %v485 = vunpack.c.l.s4 1966171168
    %v486 = vunpack.c.0.s8 %v485
    %v487 = vlaneseq
    %v488 = vshrl.u32 %v487, 7
    %v489 = vsub.s32 %v486, %v488
    %v490 = vrot.slane %v476, %v489
    %v491 = vcombine.high %v483, %v483
    %v492 = vcombine.high %v490, %v490
    %v494 = vunpack.c.l.s4 1966171168
    %v495 = vunpack.c.0.s8 %v494
    %v496 = vlaneseq
    %v497 = vshrl.u32 %v496, 7
    %v498 = vsub.s32 %v495, %v497
    %v499 = vrot.slane %v483, %v498
    %v501 = vunpack.c.l.s4 1966171168
    %v502 = vunpack.c.0.s8 %v501
    %v503 = vlaneseq
    %v504 = vshrl.u32 %v503, 7
    %v505 = vsub.s32 %v502, %v504
    %v506 = vrot.slane %v490, %v505
    %v508 = vunpack.c.l.s4 1966171168
    %v509 = vunpack.c.0.s8 %v508
    %v510 = vlaneseq
    %v511 = vshrl.u32 %v510, 7
    %v512 = vsub.s32 %v509, %v511
    %v513 = vrot.slane %v491, %v512
    %v515 = vunpack.c.l.s4 1966171168
    %v516 = vunpack.c.0.s8 %v515
    %v517 = vlaneseq
    %v518 = vshrl.u32 %v517, 7
    %v519 = vsub.s32 %v516, %v518
    %v520 = vrot.slane %v492, %v519
    %v521 = vcombine.high %v499, %v499
    %v522 = vcombine.high %v506, %v506
    %v523 = vcombine.high %v513, %v513
    %v524 = vcombine.high %v520, %v520
    %v525 = vcombine.high %v41, %v41
    %v527 = vunpack.c.l.s4 1966171168
    %v528 = vunpack.c.0.s8 %v527
    %v529 = vlaneseq
    %v530 = vshrl.u32 %v529, 7
    %v531 = vsub.s32 %v528, %v530
    %v532 = vrot.slane %v41, %v531
    %v534 = vunpack.c.l.s4 1966171168
    %v535 = vunpack.c.0.s8 %v534
    %v536 = vlaneseq
    %v537 = vshrl.u32 %v536, 7
    %v538 = vsub.s32 %v535, %v537
    %v539 = vrot.slane %v525, %v538
    %v540 = vcombine.high %v532, %v532
    %v541 = vcombine.high %v539, %v539
    %v543 = vunpack.c.l.s4 1966171168
    %v544 = vunpack.c.0.s8 %v543
    %v545 = vlaneseq
    %v546 = vshrl.u32 %v545, 7
    %v547 = vsub.s32 %v544, %v546
    %v548 = vrot.slane %v532, %v547
    %v550 = vunpack.c.l.s4 1966171168
    %v551 = vunpack.c.0.s8 %v550
    %v552 = vlaneseq
    %v553 = vshrl.u32 %v552, 7
    %v554 = vsub.s32 %v551, %v553
    %v555 = vrot.slane %v539, %v554
    %v557 = vunpack.c.l.s4 1966171168
    %v558 = vunpack.c.0.s8 %v557
    %v559 = vlaneseq
    %v560 = vshrl.u32 %v559, 7
    %v561 = vsub.s32 %v558, %v560
    %v562 = vrot.slane %v540, %v561
    %v564 = vunpack.c.l.s4 1966171168
    %v565 = vunpack.c.0.s8 %v564
    %v566 = vlaneseq
    %v567 = vshrl.u32 %v566, 7
    %v568 = vsub.s32 %v565, %v567
    %v569 = vrot.slane %v541, %v568
    %v570 = vcombine.high %v548, %v548
    %v571 = vcombine.high %v555, %v555
    %v572 = vcombine.high %v562, %v562
    %v573 = vcombine.high %v569, %v569
    %v574 = vcombine.high %v42, %v42
    %v576 = vunpack.c.l.s4 1966171168
    %v577 = vunpack.c.0.s8 %v576
    %v578 = vlaneseq
    %v579 = vshrl.u32 %v578, 7
    %v580 = vsub.s32 %v577, %v579
    %v581 = vrot.slane %v42, %v580
    %v583 = vunpack.c.l.s4 1966171168
    %v584 = vunpack.c.0.s8 %v583
    %v585 = vlaneseq
    %v586 = vshrl.u32 %v585, 7
    %v587 = vsub.s32 %v584, %v586
    %v588 = vrot.slane %v574, %v587
    %v589 = vcombine.high %v581, %v581
    %v590 = vcombine.high %v588, %v588
    %v592 = vunpack.c.l.s4 1966171168
    %v593 = vunpack.c.0.s8 %v592
    %v594 = vlaneseq
    %v595 = vshrl.u32 %v594, 7
    %v596 = vsub.s32 %v593, %v595
    %v597 = vrot.slane %v581, %v596
    %v599 = vunpack.c.l.s4 1966171168
    %v600 = vunpack.c.0.s8 %v599
    %v601 = vlaneseq
    %v602 = vshrl.u32 %v601, 7
    %v603 = vsub.s32 %v600, %v602
    %v604 = vrot.slane %v588, %v603
    %v606 = vunpack.c.l.s4 1966171168
    %v607 = vunpack.c.0.s8 %v606
    %v608 = vlaneseq
    %v609 = vshrl.u32 %v608, 7
    %v610 = vsub.s32 %v607, %v609
    %v611 = vrot.slane %v589, %v610
    %v613 = vunpack.c.l.s4 1966171168
    %v614 = vunpack.c.0.s8 %v613
    %v615 = vlaneseq
    %v616 = vshrl.u32 %v615, 7
    %v617 = vsub.s32 %v614, %v616
    %v618 = vrot.slane %v590, %v617
    %v619 = vcombine.high %v597, %v597
    %v620 = vcombine.high %v604, %v604
    %v621 = vcombine.high %v611, %v611
    %v622 = vcombine.high %v618, %v618
    %v624 = vunpack.c.l.s4 1966171168
    %v625 = vunpack.c.0.s8 %v624
    %v626 = vlaneseq
    %v627 = vshrl.u32 %v626, 7
    %v628 = vsub.s32 %v625, %v627
    %v629 = vrot.slane %v43, %v628
    %v630 = vcombine.high %v629, %v629
    %v632 = vunpack.c.l.s4 1966171168
    %v633 = vunpack.c.0.s8 %v632
    %v634 = vlaneseq
    %v635 = vshrl.u32 %v634, 7
    %v636 = vsub.s32 %v633, %v635
    %v637 = vrot.slane %v629, %v636
    %v639 = vunpack.c.l.s4 1966171168
    %v640 = vunpack.c.0.s8 %v639
    %v641 = vlaneseq
    %v642 = vshrl.u32 %v641, 7
    %v643 = vsub.s32 %v640, %v642
    %v644 = vrot.slane %v630, %v643
    %v1087 = vunpack.c.l.b16 %v44
    %v1088 = vunpack.c.h.b16 %v44
    %v1089 = vunpack.c.l.b16 %v45
    %v1090 = vunpack.c.h.b16 %v45
    %v1091 = vunpack.c.l.b16 %v46
    %v1092 = vunpack.c.h.b16 %v46
    %v1093 = vunpack.c.l.b16 %v47
    %v1094 = vunpack.c.h.b16 %v47
    %v1095 = vunpack.c.l.b16 %v48
    %v1096 = vunpack.c.h.b16 %v48
    %v1097 = vunpack.c.l.b16 %v49
    %v1098 = vunpack.c.h.b16 %v49
    %v1099 = vunpack.c.l.b16 %v50
    %v1100 = vunpack.c.h.b16 %v50
    %v1101 = vunpack.c.l.b16 %v51
    %v1102 = vunpack.c.h.b16 %v51
    %v1103 = vunpack.c.l.b16 %v52
    %v1104 = vunpack.c.h.b16 %v52
    %v1105 = vunpack.c.l.b16 %v53
    %v1106 = vunpack.c.h.b16 %v53
    %v1107 = vunpack.c.l.b16 %v54
    %v1108 = vunpack.c.h.b16 %v54
    %v1109 = vunpack.c.l.b16 %v55
    %v1110 = vunpack.c.h.b16 %v55
    %v1111 = vunpack.c.l.b16 %v56
    %v1112 = vunpack.c.h.b16 %v56
    %v1113 = vunpack.c.l.b16 %v57
    %v1114 = vunpack.c.h.b16 %v57
    %v1115 = vunpack.c.l.b16 %v58
    %v1116 = vunpack.c.h.b16 %v58
    %v1117 = vunpack.c.l.b16 %v59
    %v1118 = vunpack.c.h.b16 %v59
    %v1119 = vunpack.c.l.b16 %v60
    %v1120 = vunpack.c.h.b16 %v60
    %v1121 = vunpack.c.l.b16 %v61
    %v1122 = vunpack.c.h.b16 %v61
    %v1123 = vunpack.c.l.b16 %v62
    %v1124 = vunpack.c.h.b16 %v62
    %v1125 = vunpack.c.l.b16 %v63
    %v1126 = vunpack.c.h.b16 %v63
    %v1127 = vunpack.c.l.b16 %v64
    %v1128 = vunpack.c.h.b16 %v64
    %v1129 = vunpack.c.l.b16 %v65
    %v1130 = vunpack.c.h.b16 %v65
    %v1131 = vunpack.c.l.b16 %v66
    %v1132 = vunpack.c.h.b16 %v66
    %v1133 = vunpack.c.l.b16 %v67
    %v1134 = vunpack.c.h.b16 %v67
    %v1135 = vunpack.c.l.b16 %v68
    %v1136 = vunpack.c.h.b16 %v68
    %v1137 = vunpack.c.l.b16 %v69
    %v1138 = vunpack.c.h.b16 %v69
    %v1139 = vunpack.c.l.b16 %v70
    %v1140 = vunpack.c.h.b16 %v70
    %v1141 = vunpack.c.l.b16 %v71
    %v1142 = vunpack.c.h.b16 %v71
    %v1143 = vunpack.c.l.b16 %v72
    %v1144 = vunpack.c.h.b16 %v72
    %v1145 = vunpack.c.l.b16 %v73
    %v1146 = vunpack.c.h.b16 %v73
    %v1147 = vunpack.c.l.b16 %v74
    %v1148 = vunpack.c.h.b16 %v74
    %v1149 = vunpack.c.l.b16 %v75
    %v1150 = vunpack.c.h.b16 %v75
    %v1151 = vunpack.c.l.b16 %v76
    %v1152 = vunpack.c.h.b16 %v76
    %v1153 = vunpack.c.l.b16 %v77
    %v1154 = vunpack.c.h.b16 %v77
    %v1155 = vunpack.c.l.b16 %v78
    %v1156 = vunpack.c.h.b16 %v78
    %v1157 = vunpack.c.l.b16 %v79
    %v1158 = vunpack.c.h.b16 %v79
    %v1159 = vunpack.c.l.b16 %v80
    %v1160 = vunpack.c.h.b16 %v80
    %v1161 = vunpack.c.l.b16 %v81
    %v1162 = vunpack.c.h.b16 %v81
    %v1163 = vunpack.c.l.b16 %v82
    %v1164 = vunpack.c.h.b16 %v82
    %v1165 = vunpack.c.l.b16 %v83
    %v1166 = vunpack.c.h.b16 %v83
    %v1167 = vunpack.c.l.b16 %v84
    %v1168 = vunpack.c.h.b16 %v84
    %v1169 = vunpack.c.l.b16 %v85
    %v1170 = vunpack.c.h.b16 %v85
    %v1171 = vunpack.c.l.b16 %v86
    %v1172 = vunpack.c.h.b16 %v86
    %v1173 = vunpack.c.l.b16 %v87
    %v1174 = vunpack.c.h.b16 %v87
    %v1175 = vunpack.c.l.b16 %v88
    %v1176 = vunpack.c.h.b16 %v88
    %v1177 = vunpack.c.l.b16 %v89
    %v1178 = vunpack.c.h.b16 %v89
    %v1179 = vunpack.c.l.b16 %v90
    %v1180 = vunpack.c.h.b16 %v90
    %v1181 = vunpack.c.l.b16 %v91
    %v1182 = vunpack.c.h.b16 %v91
    %v1183 = vunpack.c.l.b16 %v92
    %v1184 = vunpack.c.h.b16 %v92
    %v1185 = vunpack.c.l.b16 %v93
    %v1186 = vunpack.c.h.b16 %v93
    %v1187 = vunpack.c.l.b16 %v94
    %v1188 = vunpack.c.h.b16 %v94
    %v1189 = vunpack.c.l.b16 %v95
    %v1190 = vunpack.c.h.b16 %v95
    %v1191 = vunpack.c.l.b16 %v96
    %v1192 = vunpack.c.h.b16 %v96
    %v1193 = vunpack.c.l.b16 %v97
    %v1194 = vunpack.c.h.b16 %v97
    %v1195 = vunpack.c.l.b16 %v98
    %v1196 = vunpack.c.h.b16 %v98
    %v1197 = vunpack.c.l.b16 %v99
    %v1198 = vunpack.c.h.b16 %v99
    %v1199 = vunpack.c.l.b16 %v100
    %v1200 = vunpack.c.h.b16 %v100
    %v1201 = vunpack.c.l.b16 %v101
    %v1202 = vunpack.c.h.b16 %v101
    %v1203 = vunpack.c.l.b16 %v102
    %v1204 = vunpack.c.h.b16 %v102
    %v1205 = vunpack.c.l.b16 %v103
    %v1206 = vunpack.c.h.b16 %v103
    %v1207 = vunpack.c.l.b16 %v104
    %v1208 = vunpack.c.h.b16 %v104
    %v1209 = vunpack.c.l.b16 %v105
    %v1210 = vunpack.c.h.b16 %v105
    %v1211 = vunpack.c.l.b16 %v106
    %v1212 = vunpack.c.h.b16 %v106
    %v1213 = vunpack.c.l.b16 %v107
    %v1214 = vunpack.c.h.b16 %v107
    %v1215 = vunpack.c.l.b16 %v108
    %v1216 = vunpack.c.h.b16 %v108
    %v1217 = vunpack.c.l.b16 %v109
    %v1218 = vunpack.c.h.b16 %v109
    %v1219 = vunpack.c.l.b16 %v110
    %v1220 = vunpack.c.h.b16 %v110
    %v1221 = vunpack.c.l.b16 %v111
    %v1222 = vunpack.c.h.b16 %v111
    %v1223 = vunpack.c.l.b16 %v112
    %v1224 = vunpack.c.h.b16 %v112
    %v1225 = vunpack.c.l.b16 %v113
    %v1226 = vunpack.c.h.b16 %v113
    %v1227 = vunpack.c.l.b16 %v114
    %v1228 = vunpack.c.h.b16 %v114
    %v1229 = vunpack.c.l.b16 %v115
    %v1230 = vunpack.c.h.b16 %v115
    %v1231 = vunpack.c.l.b16 %v116
    %v1232 = vunpack.c.h.b16 %v116
    %v1233 = vunpack.c.l.b16 %v117
    %v1234 = vunpack.c.h.b16 %v117
    %v1235 = vunpack.c.l.b16 %v118
    %v1236 = vunpack.c.h.b16 %v118
    %v1237 = vunpack.c.l.b16 %v119
    %v1238 = vunpack.c.h.b16 %v119
    %v1239 = vunpack.c.l.b16 %v120
    %v1240 = vunpack.c.h.b16 %v120
    %v1241 = vunpack.c.l.b16 %v121
    %v1242 = vunpack.c.h.b16 %v121
    %v1243 = vunpack.c.l.b16 %v122
    %v1244 = vunpack.c.h.b16 %v122
    %v1245 = vunpack.c.l.b16 %v123
    %v1246 = vunpack.c.h.b16 %v123
    %v1247 = vunpack.c.l.b16 %v124
    %v1248 = vunpack.c.h.b16 %v124
    %v1249 = vunpack.c.l.b16 %v125
    %v1250 = vunpack.c.h.b16 %v125
    %v1251 = vunpack.c.l.b16 %v126
    %v1252 = vunpack.c.h.b16 %v126
    %v1253 = vunpack.c.l.b16 %v127
    %v1254 = vunpack.c.h.b16 %v127
    %v1255 = vunpack.c.l.b16 %v128
    %v1256 = vunpack.c.h.b16 %v128
    %v1257 = vunpack.c.l.b16 %v129
    %v1258 = vunpack.c.h.b16 %v129
    %v1259 = vunpack.c.l.b16 %v130
    %v1260 = vunpack.c.h.b16 %v130
    %v1261 = vunpack.c.l.b16 %v131
    %v1262 = vunpack.c.h.b16 %v131
    %v1263 = vunpack.c.l.b16 %v132
    %v1264 = vunpack.c.h.b16 %v132
    %v1265 = vunpack.c.l.b16 %v133
    %v1266 = vunpack.c.h.b16 %v133
    %v1267 = vunpack.c.l.b16 %v134
    %v1268 = vunpack.c.h.b16 %v134
    %v1269 = vunpack.c.l.b16 %v135
    %v1270 = vunpack.c.h.b16 %v135
    %v1271 = vunpack.c.l.b16 %v136
    %v1272 = vunpack.c.h.b16 %v136
    %v1273 = vunpack.c.l.b16 %v137
    %v1274 = vunpack.c.h.b16 %v137
    %v1275 = vunpack.c.l.b16 %v138
    %v1276 = vunpack.c.h.b16 %v138
    %v1277 = vunpack.c.l.b16 %v139
    %v1278 = vunpack.c.h.b16 %v139
    %v1279 = vunpack.c.l.b16 %v140
    %v1280 = vunpack.c.h.b16 %v140
    %v1281 = vunpack.c.l.b16 %v141
    %v1282 = vunpack.c.h.b16 %v141
    %v1283 = vunpack.c.l.b16 %v142
    %v1284 = vunpack.c.h.b16 %v142
    %v1285 = vunpack.c.l.b16 %v143
    %v1286 = vunpack.c.h.b16 %v143
    %v1287 = vunpack.c.l.b16 %v144
    %v1288 = vunpack.c.h.b16 %v144
    %v1289 = vunpack.c.l.b16 %v145
    %v1290 = vunpack.c.h.b16 %v145
    %v1291 = vunpack.c.l.b16 %v146
    %v1292 = vunpack.c.h.b16 %v146
    %v1293 = vunpack.c.l.b16 %v147
    %v1294 = vunpack.c.h.b16 %v147
    %v1295 = vunpack.c.l.b16 %v148
    %v1296 = vunpack.c.h.b16 %v148
    %v1297 = vunpack.c.l.b16 %v149
    %v1298 = vunpack.c.h.b16 %v149
    %v1299 = vunpack.c.l.b16 %v150
    %v1300 = vunpack.c.h.b16 %v150
    %v1301 = vunpack.c.l.b16 %v151
    %v1302 = vunpack.c.h.b16 %v151
    %v1303 = vunpack.c.l.b16 %v152
    %v1304 = vunpack.c.h.b16 %v152
    %v1305 = vunpack.c.l.b16 %v153
    %v1306 = vunpack.c.h.b16 %v153
    %v1307 = vunpack.c.l.b16 %v154
    %v1308 = vunpack.c.h.b16 %v154
    %v1309 = vunpack.c.l.b16 %v155
    %v1310 = vunpack.c.h.b16 %v155
    %v1311 = vunpack.c.l.b16 %v156
    %v1312 = vunpack.c.h.b16 %v156
    %v1313 = vunpack.c.l.b16 %v157
    %v1314 = vunpack.c.h.b16 %v157
    %v1315 = vunpack.c.l.b16 %v158
    %v1316 = vunpack.c.h.b16 %v158
    %v1317 = vunpack.c.l.b16 %v159
    %v1318 = vunpack.c.h.b16 %v159
    %v1319 = vunpack.c.l.b16 %v160
    %v1320 = vunpack.c.h.b16 %v160
    %v1321 = vunpack.c.l.b16 %v161
    %v1322 = vunpack.c.h.b16 %v161
    %v1323 = vunpack.c.l.b16 %v162
    %v1324 = vunpack.c.h.b16 %v162
    %v1325 = vunpack.c.l.b16 %v163
    %v1326 = vunpack.c.h.b16 %v163
    %v1327 = vunpack.c.l.b16 %v164
    %v1328 = vunpack.c.h.b16 %v164
    %v1329 = vunpack.c.l.b16 %v165
    %v1330 = vunpack.c.h.b16 %v165
    %v1331 = vunpack.c.l.b16 %v166
    %v1332 = vunpack.c.h.b16 %v166
    %v1333 = vunpack.c.l.b16 %v167
    %v1334 = vunpack.c.h.b16 %v167
    %v1335 = vunpack.c.l.b16 %v168
    %v1336 = vunpack.c.h.b16 %v168
    %v1337 = vunpack.c.l.b16 %v169
    %v1338 = vunpack.c.h.b16 %v169
    %v1339 = vunpack.c.l.b16 %v170
    %v1340 = vunpack.c.h.b16 %v170
    %v1341 = vunpack.c.l.b16 %v171
    %v1342 = vunpack.c.h.b16 %v171
    %v1343 = vunpack.c.l.b16 %v172
    %v1344 = vunpack.c.h.b16 %v172
    %v1345 = vunpack.c.l.b16 %v173
    %v1346 = vunpack.c.h.b16 %v173
    %v1347 = vunpack.c.l.b16 %v174
    %v1348 = vunpack.c.h.b16 %v174
    %v1349 = vunpack.c.l.b16 %v175
    %v1350 = vunpack.c.h.b16 %v175
    %v1351 = vunpack.c.l.b16 %v176
    %v1352 = vunpack.c.h.b16 %v176
    %v1353 = vunpack.c.l.b16 %v177
    %v1354 = vunpack.c.h.b16 %v177
    %v1355 = vunpack.c.l.b16 %v178
    %v1356 = vunpack.c.h.b16 %v178
    %v1357 = vunpack.c.l.b16 %v179
    %v1358 = vunpack.c.h.b16 %v179
    %v1359 = vunpack.c.l.b16 %v180
    %v1360 = vunpack.c.h.b16 %v180
    %v1361 = vunpack.c.l.b16 %v181
    %v1362 = vunpack.c.h.b16 %v181
    %v1363 = vunpack.c.l.b16 %v182
    %v1364 = vunpack.c.h.b16 %v182
    %v1365 = vunpack.c.l.b16 %v183
    %v1366 = vunpack.c.h.b16 %v183
    %v1367 = vunpack.c.l.b16 %v184
    %v1368 = vunpack.c.h.b16 %v184
    %v1369 = vunpack.c.l.b16 %v185
    %v1370 = vunpack.c.h.b16 %v185
    %v1371 = vunpack.c.l.b16 %v186
    %v1372 = vunpack.c.h.b16 %v186
    %v1373 = vunpack.c.l.b16 %v187
    %v1374 = vunpack.c.h.b16 %v187
    %v1375 = vunpack.c.l.b16 %v188
    %v1376 = vunpack.c.h.b16 %v188
    %v1377 = vunpack.c.l.b16 %v189
    %v1378 = vunpack.c.h.b16 %v189
    %v1379 = vunpack.c.l.b16 %v190
    %v1380 = vunpack.c.h.b16 %v190
    %v1381 = vunpack.c.l.b16 %v191
    %v1382 = vunpack.c.h.b16 %v191
    %v1383 = vunpack.c.l.b16 %v192
    %v1384 = vunpack.c.h.b16 %v192
    %v1385 = vunpack.c.l.b16 %v193
    %v1386 = vunpack.c.h.b16 %v193
    %v1387 = vunpack.c.l.b16 %v194
    %v1388 = vunpack.c.h.b16 %v194
    %v1389 = vunpack.c.l.b16 %v195
    %v1390 = vunpack.c.h.b16 %v195
    %v1391 = vunpack.c.l.b16 %v196
    %v1392 = vunpack.c.h.b16 %v196
    %v1393 = vunpack.c.l.b16 %v197
    %v1394 = vunpack.c.h.b16 %v197
    %v1395 = vunpack.c.l.b16 %v198
    %v1396 = vunpack.c.h.b16 %v198
    %v1397 = vunpack.c.l.b16 %v199
    %v1398 = vunpack.c.h.b16 %v199
    %v1399 = vunpack.c.l.b16 %v200
    %v1400 = vunpack.c.h.b16 %v200
    %v1401 = vunpack.c.l.b16 %v201
    %v1402 = vunpack.c.h.b16 %v201
    %v1403 = vunpack.c.l.b16 %v202
    %v1404 = vunpack.c.h.b16 %v202
    %v1405 = vunpack.c.l.b16 %v203
    %v1406 = vunpack.c.h.b16 %v203
    %v1407 = vunpack.c.l.b16 %v204
    %v1408 = vunpack.c.h.b16 %v204
    %v1409 = vunpack.c.l.b16 %v205
    %v1410 = vunpack.c.h.b16 %v205
    %v1411 = vunpack.c.l.b16 %v206
    %v1412 = vunpack.c.h.b16 %v206
    %v1413 = vunpack.c.l.b16 %v207
    %v1414 = vunpack.c.h.b16 %v207
    %v1415 = vunpack.c.l.b16 %v208
    %v1416 = vunpack.c.h.b16 %v208
    %v1417 = vunpack.c.l.b16 %v209
    %v1418 = vunpack.c.h.b16 %v209
    %v1419 = vunpack.c.l.b16 %v210
    %v1420 = vunpack.c.h.b16 %v210
    %v1421 = vunpack.c.l.b16 %v211
    %v1422 = vunpack.c.h.b16 %v211
    %v1423 = vunpack.c.l.b16 %v212
    %v1424 = vunpack.c.h.b16 %v212
    %v1425 = vunpack.c.l.b16 %v213
    %v1426 = vunpack.c.h.b16 %v213
    %v1427 = vunpack.c.l.b16 %v214
    %v1428 = vunpack.c.h.b16 %v214
    %v1429 = vunpack.c.l.b16 %v215
    %v1430 = vunpack.c.h.b16 %v215
    %v1431 = vunpack.c.l.b16 %v216
    %v1432 = vunpack.c.h.b16 %v216
    %v1433 = vunpack.c.l.b16 %v217
    %v1434 = vunpack.c.h.b16 %v217
    %v1435 = vunpack.c.l.b16 %v218
    %v1436 = vunpack.c.h.b16 %v218
    %v1437 = vunpack.c.l.b16 %v219
    %v1438 = vunpack.c.h.b16 %v219
    %v1439 = vunpack.c.l.b16 %v220
    %v1440 = vunpack.c.h.b16 %v220
    %v1441 = vunpack.c.l.b16 %v221
    %v1442 = vunpack.c.h.b16 %v221
    %v1443 = vunpack.c.l.b16 %v222
    %v1444 = vunpack.c.h.b16 %v222
    %v1445 = vunpack.c.l.b16 %v223
    %v1446 = vunpack.c.h.b16 %v223
    %v1447 = vunpack.c.l.b16 %v224
    %v1448 = vunpack.c.h.b16 %v224
    %v1449 = vunpack.c.l.b16 %v225
    %v1450 = vunpack.c.h.b16 %v225
    %v1451 = vunpack.c.l.b16 %v226
    %v1452 = vunpack.c.h.b16 %v226
    %v1453 = vunpack.c.l.b16 %v227
    %v1454 = vunpack.c.h.b16 %v227
    %v1455 = vunpack.c.l.b16 %v228
    %v1456 = vunpack.c.h.b16 %v228
    %v1457 = vunpack.c.l.b16 %v229
    %v1458 = vunpack.c.h.b16 %v229
    %v1459 = vunpack.c.l.b16 %v230
    %v1460 = vunpack.c.h.b16 %v230
    %v1461 = vunpack.c.l.b16 %v231
    %v1462 = vunpack.c.h.b16 %v231
    %v1463 = vunpack.c.l.b16 %v232
    %v1464 = vunpack.c.h.b16 %v232
    %v1465 = vunpack.c.l.b16 %v233
    %v1466 = vunpack.c.h.b16 %v233
    %v1467 = vunpack.c.l.b16 %v234
    %v1468 = vunpack.c.h.b16 %v234
    %v1469 = vunpack.c.l.b16 %v235
    %v1470 = vunpack.c.h.b16 %v235
    %v1471 = vunpack.c.l.b16 %v236
    %v1472 = vunpack.c.h.b16 %v236
    %v1473 = vunpack.c.l.b16 %v237
    %v1474 = vunpack.c.h.b16 %v237
    %v1475 = vunpack.c.l.b16 %v238
    %v1476 = vunpack.c.h.b16 %v238
    %v1477 = vunpack.c.l.b16 %v239
    %v1478 = vunpack.c.h.b16 %v239
    %v1479 = vunpack.c.l.b16 %v240
    %v1480 = vunpack.c.h.b16 %v240
    %v1481 = vunpack.c.l.b16 %v241
    %v1482 = vunpack.c.h.b16 %v241
    %v1483 = vunpack.c.l.b16 %v242
    %v1484 = vunpack.c.h.b16 %v242
    %v1485 = vunpack.c.l.b16 %v243
    %v1486 = vunpack.c.h.b16 %v243
    %v1487 = vunpack.c.l.b16 %v244
    %v1488 = vunpack.c.h.b16 %v244
    %v1489 = vunpack.c.l.b16 %v245
    %v1490 = vunpack.c.h.b16 %v245
    %v1491 = vunpack.c.l.b16 %v246
    %v1492 = vunpack.c.h.b16 %v246
    %v1493 = vunpack.c.l.b16 %v247
    %v1494 = vunpack.c.h.b16 %v247
    %v1495 = vunpack.c.l.b16 %v248
    %v1496 = vunpack.c.h.b16 %v248
    %v1497 = vunpack.c.l.b16 %v249
    %v1498 = vunpack.c.h.b16 %v249
    %v1499 = vunpack.c.l.b16 %v250
    %v1500 = vunpack.c.h.b16 %v250
    %v1501 = vunpack.c.l.b16 %v251
    %v1502 = vunpack.c.h.b16 %v251
    %v1503 = vunpack.c.l.b16 %v252
    %v1504 = vunpack.c.h.b16 %v252
    %v1505 = vunpack.c.l.b16 %v253
    %v1506 = vunpack.c.h.b16 %v253
    %v1507 = vunpack.c.l.b16 %v254
    %v1508 = vunpack.c.h.b16 %v254
    %v1509 = vunpack.c.l.b16 %v255
    %v1510 = vunpack.c.h.b16 %v255
    %v1511 = vunpack.c.l.b16 %v256
    %v1512 = vunpack.c.h.b16 %v256
    %v1513 = vunpack.c.l.b16 %v257
    %v1514 = vunpack.c.h.b16 %v257
    %v1515 = vunpack.c.l.b16 %v258
    %v1516 = vunpack.c.h.b16 %v258
    %v1517 = vunpack.c.l.b16 %v259
    %v1518 = vunpack.c.h.b16 %v259
    %v1519 = vunpack.c.l.b16 %v260
    %v1520 = vunpack.c.h.b16 %v260
    %v1521 = vunpack.c.l.b16 %v261
    %v1522 = vunpack.c.h.b16 %v261
    %v1523 = vunpack.c.l.b16 %v262
    %v1524 = vunpack.c.h.b16 %v262
    %v1525 = vunpack.c.l.b16 %v263
    %v1526 = vunpack.c.h.b16 %v263
    %v1527 = vunpack.c.l.b16 %v264
    %v1528 = vunpack.c.h.b16 %v264
    %v1529 = vunpack.c.l.b16 %v265
    %v1530 = vunpack.c.h.b16 %v265
    %v1531 = vunpack.c.l.b16 %v266
    %v1532 = vunpack.c.h.b16 %v266
    %v1533 = vunpack.c.l.b16 %v267
    %v1534 = vunpack.c.h.b16 %v267
    %v1535 = vunpack.c.l.b16 %v268
    %v1536 = vunpack.c.h.b16 %v268
    %v1537 = vunpack.c.l.b16 %v269
    %v1538 = vunpack.c.h.b16 %v269
    %v1539 = vunpack.c.l.b16 %v270
    %v1540 = vunpack.c.h.b16 %v270
    %v1541 = vunpack.c.l.b16 %v271
    %v1542 = vunpack.c.h.b16 %v271
    %v1543 = vunpack.c.l.b16 %v272
    %v1544 = vunpack.c.h.b16 %v272
    %v1545 = vunpack.c.l.b16 %v273
    %v1546 = vunpack.c.h.b16 %v273
    %v1547 = vunpack.c.l.b16 %v274
    %v1548 = vunpack.c.h.b16 %v274
    %v1549 = vunpack.c.l.b16 %v275
    %v1550 = vunpack.c.h.b16 %v275
    %v1551 = vunpack.c.l.b16 %v276
    %v1552 = vunpack.c.h.b16 %v276
    %v1553 = vunpack.c.l.b16 %v277
    %v1554 = vunpack.c.h.b16 %v277
    %v1555 = vunpack.c.l.b16 %v278
    %v1556 = vunpack.c.h.b16 %v278
    %v1557 = vunpack.c.l.b16 %v279
    %v1558 = vunpack.c.h.b16 %v279
    %v1559 = vunpack.c.l.b16 %v280
    %v1560 = vunpack.c.h.b16 %v280
    %v1561 = vunpack.c.l.b16 %v281
    %v1562 = vunpack.c.h.b16 %v281
    %v1563 = vunpack.c.l.b16 %v282
    %v1564 = vunpack.c.h.b16 %v282
    %v1565 = vunpack.c.l.b16 %v283
    %v1566 = vunpack.c.h.b16 %v283
    %v1567 = vunpack.c.l.b16 %v284
    %v1568 = vunpack.c.h.b16 %v284
    %v1569 = vunpack.c.l.b16 %v285
    %v1570 = vunpack.c.h.b16 %v285
    %v1571 = vunpack.c.l.b16 %v286
    %v1572 = vunpack.c.h.b16 %v286
    %v1573 = vunpack.c.l.b16 %v287
    %v1574 = vunpack.c.h.b16 %v287
    %v1575 = vunpack.c.l.b16 %v288
    %v1576 = vunpack.c.h.b16 %v288
    %v1577 = vunpack.c.l.b16 %v289
    %v1578 = vunpack.c.h.b16 %v289
    %v1579 = vunpack.c.l.b16 %v290
    %v1580 = vunpack.c.h.b16 %v290
    %v1581 = vunpack.c.l.b16 %v291
    %v1582 = vunpack.c.h.b16 %v291
    %v1583 = vunpack.c.l.b16 %v292
    %v1584 = vunpack.c.h.b16 %v292
    %v1585 = vunpack.c.l.b16 %v293
    %v1586 = vunpack.c.h.b16 %v293
    %v1587 = vunpack.c.l.b16 %v294
    %v1588 = vunpack.c.h.b16 %v294
    %v1589 = vunpack.c.l.b16 %v295
    %v1590 = vunpack.c.h.b16 %v295
    %v1591 = vunpack.c.l.b16 %v296
    %v1592 = vunpack.c.h.b16 %v296
    %v1593 = vunpack.c.l.b16 %v297
    %v1594 = vunpack.c.h.b16 %v297
    %v1595 = vunpack.c.l.b16 %v298
    %v1596 = vunpack.c.h.b16 %v298
    %v1597 = vunpack.c.l.b16 %v299
    %v1598 = vunpack.c.h.b16 %v299
    %v1599 = vunpack.c.l.b16 %v300
    %v1600 = vunpack.c.h.b16 %v300
    %v1601 = vunpack.c.l.b16 %v301
    %v1602 = vunpack.c.h.b16 %v301
    %v1603 = vunpack.c.l.b16 %v302
    %v1604 = vunpack.c.h.b16 %v302
    %v1605 = vunpack.c.l.b16 %v303
    %v1606 = vunpack.c.h.b16 %v303
    %v1607 = vunpack.c.l.b16 %v304
    %v1608 = vunpack.c.h.b16 %v304
    %v1609 = vunpack.c.l.b16 %v305
    %v1610 = vunpack.c.h.b16 %v305
    %v1611 = vunpack.c.l.b16 %v306
    %v1612 = vunpack.c.h.b16 %v306
    %v1613 = vunpack.c.l.b16 %v307
    %v1614 = vunpack.c.h.b16 %v307
    %v1615 = vunpack.c.l.b16 %v308
    %v1616 = vunpack.c.h.b16 %v308
    %v1617 = vunpack.c.l.b16 %v309
    %v1618 = vunpack.c.h.b16 %v309
    %v1619 = vunpack.c.l.b16 %v310
    %v1620 = vunpack.c.h.b16 %v310
    %v1621 = vunpack.c.l.b16 %v311
    %v1622 = vunpack.c.h.b16 %v311
    %v1623 = vunpack.c.l.b16 %v312
    %v1624 = vunpack.c.h.b16 %v312
    %v1625 = vunpack.c.l.b16 %v313
    %v1626 = vunpack.c.h.b16 %v313
    %v1627 = vunpack.c.l.b16 %v314
    %v1628 = vunpack.c.h.b16 %v314
    %v1629 = vunpack.c.l.b16 %v315
    %v1630 = vunpack.c.h.b16 %v315
    %v1631 = vunpack.c.l.b16 %v316
    %v1632 = vunpack.c.h.b16 %v316
    %v1633 = vunpack.c.l.b16 %v317
    %v1634 = vunpack.c.h.b16 %v317
    %v1635 = vunpack.c.l.b16 %v318
    %v1636 = vunpack.c.h.b16 %v318
    %v1637 = vunpack.c.l.b16 %v319
    %v1638 = vunpack.c.h.b16 %v319
    %v1639 = vunpack.c.l.b16 %v320
    %v1640 = vunpack.c.h.b16 %v320
    %v1641 = vunpack.c.l.b16 %v321
    %v1642 = vunpack.c.h.b16 %v321
    %v1643 = vunpack.c.l.b16 %v322
    %v1644 = vunpack.c.h.b16 %v322
    %v1645 = vunpack.c.l.b16 %v323
    %v1646 = vunpack.c.h.b16 %v323
    %v1647 = vunpack.c.l.b16 %v324
    %v1648 = vunpack.c.h.b16 %v324
    %v1649 = vunpack.c.l.b16 %v325
    %v1650 = vunpack.c.h.b16 %v325
    %v1651 = vunpack.c.l.b16 %v326
    %v1652 = vunpack.c.h.b16 %v326
    %v1653 = vunpack.c.l.b16 %v327
    %v1654 = vunpack.c.h.b16 %v327
    %v1655 = vunpack.c.l.b16 %v328
    %v1656 = vunpack.c.h.b16 %v328
    %v1657 = vunpack.c.l.b16 %v329
    %v1658 = vunpack.c.h.b16 %v329
    %v1659 = vunpack.c.l.b16 %v330
    %v1660 = vunpack.c.h.b16 %v330
    %v1661 = vunpack.c.l.b16 %v331
    %v1662 = vunpack.c.h.b16 %v331
    %v1663 = vunpack.c.l.b16 %v332
    %v1664 = vunpack.c.h.b16 %v332
    %v1665 = vunpack.c.l.b16 %v333
    %v1666 = vunpack.c.h.b16 %v333
    %v1667 = vunpack.c.l.b16 %v334
    %v1668 = vunpack.c.h.b16 %v334
    %v1669 = vunpack.c.l.b16 %v335
    %v1670 = vunpack.c.h.b16 %v335
    %v1671 = vunpack.c.l.b16 %v336
    %v1672 = vunpack.c.h.b16 %v336
    %v1673 = vunpack.c.l.b16 %v337
    %v1674 = vunpack.c.h.b16 %v337
    %v1675 = vunpack.c.l.b16 %v338
    %v1676 = vunpack.c.h.b16 %v338
    %v1677 = vunpack.c.l.b16 %v339
    %v1678 = vunpack.c.h.b16 %v339
    %v1679 = vunpack.c.l.b16 %v340
    %v1680 = vunpack.c.h.b16 %v340
    %v1681 = vunpack.c.l.b16 %v341
    %v1682 = vunpack.c.h.b16 %v341
    %v1683 = vunpack.c.l.b16 %v342
    %v1684 = vunpack.c.h.b16 %v342
    %v1685 = vunpack.c.l.b16 %v343
    %v1686 = vunpack.c.h.b16 %v343
    %v1687 = vunpack.c.l.b16 %v344
    %v1688 = vunpack.c.h.b16 %v344
    %v1689 = vunpack.c.l.b16 %v345
    %v1690 = vunpack.c.h.b16 %v345
    %v1691 = vunpack.c.l.b16 %v346
    %v1692 = vunpack.c.h.b16 %v346
    %v1693 = vunpack.c.l.b16 %v347
    %v1694 = vunpack.c.h.b16 %v347
    %v1695 = vunpack.c.l.b16 %v348
    %v1696 = vunpack.c.h.b16 %v348
    %v1697 = vunpack.c.l.b16 %v349
    %v1698 = vunpack.c.h.b16 %v349
    %v1699 = vunpack.c.l.b16 %v350
    %v1700 = vunpack.c.h.b16 %v350
    %v1701 = vunpack.c.l.b16 %v351
    %v1702 = vunpack.c.h.b16 %v351
    %v1703 = vunpack.c.l.b16 %v352
    %v1704 = vunpack.c.h.b16 %v352
    %v1705 = vunpack.c.l.b16 %v353
    %v1706 = vunpack.c.h.b16 %v353
    %v1707 = vunpack.c.l.b16 %v354
    %v1708 = vunpack.c.h.b16 %v354
    %v1709 = vunpack.c.l.b16 %v355
    %v1710 = vunpack.c.h.b16 %v355
    %v1711 = vunpack.c.l.b16 %v356
    %v1712 = vunpack.c.h.b16 %v356
    %v1713 = vunpack.c.l.b16 %v357
    %v1714 = vunpack.c.h.b16 %v357
    %v1715 = vunpack.c.l.b16 %v358
    %v1716 = vunpack.c.h.b16 %v358
    %v1717 = vunpack.c.l.b16 %v359
    %v1718 = vunpack.c.h.b16 %v359
    %v1719 = vunpack.c.l.b16 %v360
    %v1720 = vunpack.c.h.b16 %v360
    %v1721 = vunpack.c.l.b16 %v361
    %v1722 = vunpack.c.h.b16 %v361
    %v1723 = vunpack.c.l.b16 %v362
    %v1724 = vunpack.c.h.b16 %v362
    %v1725 = vunpack.c.l.b16 %v363
    %v1726 = vunpack.c.h.b16 %v363
    %v1727 = vunpack.c.l.b16 %v364
    %v1728 = vunpack.c.h.b16 %v364
    %v1729 = vunpack.c.l.b16 %v365
    %v1730 = vunpack.c.h.b16 %v365
    %v1731 = vunpack.c.l.b16 %v366
    %v1732 = vunpack.c.h.b16 %v366
    %v1733 = vunpack.c.l.b16 %v367
    %v1734 = vunpack.c.h.b16 %v367
    %v1735 = vunpack.c.l.b16 %v368
    %v1736 = vunpack.c.h.b16 %v368
    %v1737 = vunpack.c.l.b16 %v369
    %v1738 = vunpack.c.h.b16 %v369
    %v1739 = vunpack.c.l.b16 %v370
    %v1740 = vunpack.c.h.b16 %v370
    %v1741 = vunpack.c.l.b16 %v371
    %v1742 = vunpack.c.h.b16 %v371
    %v1743 = vunpack.c.l.b16 %v372
    %v1744 = vunpack.c.h.b16 %v372
    %v1745 = vunpack.c.l.b16 %v373
    %v1746 = vunpack.c.h.b16 %v373
    %v1747 = vunpack.c.l.b16 %v374
    %v1748 = vunpack.c.h.b16 %v374
    %v1749 = vunpack.c.l.b16 %v375
    %v1750 = vunpack.c.h.b16 %v375
    %v1751 = vunpack.c.l.b16 %v376
    %v1752 = vunpack.c.h.b16 %v376
    %v1753 = vunpack.c.l.b16 %v377
    %v1754 = vunpack.c.h.b16 %v377
    %v1755 = vunpack.c.l.b16 %v378
    %v1756 = vunpack.c.h.b16 %v378
    %v1757 = vunpack.c.l.b16 %v379
    %v1758 = vunpack.c.h.b16 %v379
    %v1759 = vunpack.c.l.b16 %v380
    %v1760 = vunpack.c.h.b16 %v380
    %v1761 = vunpack.c.l.b16 %v381
    %v1762 = vunpack.c.h.b16 %v381
    %v1763 = vunpack.c.l.b16 %v382
    %v1764 = vunpack.c.h.b16 %v382
    %v1765 = vunpack.c.l.b16 %v383
    %v1766 = vunpack.c.h.b16 %v383
    %v1767 = vunpack.c.l.b16 %v384
    %v1768 = vunpack.c.h.b16 %v384
    %v1769 = vunpack.c.l.b16 %v385
    %v1770 = vunpack.c.h.b16 %v385
    %v1771 = vunpack.c.l.b16 %v386
    %v1772 = vunpack.c.h.b16 %v386
    %v1773 = vunpack.c.l.b16 %v387
    %v1774 = vunpack.c.h.b16 %v387
    %v1775 = vunpack.c.l.b16 %v388
    %v1776 = vunpack.c.h.b16 %v388
    %v1777 = vunpack.c.l.b16 %v389
    %v1778 = vunpack.c.h.b16 %v389
    %v1779 = vunpack.c.l.b16 %v390
    %v1780 = vunpack.c.h.b16 %v390
    %v1781 = vunpack.c.l.b16 %v391
    %v1782 = vunpack.c.h.b16 %v391
    %v1783 = vunpack.c.l.b16 %v392
    %v1784 = vunpack.c.h.b16 %v392
    %v1785 = vunpack.c.l.b16 %v393
    %v1786 = vunpack.c.h.b16 %v393
    %v1787 = vunpack.c.l.b16 %v394
    %v1788 = vunpack.c.h.b16 %v394
    %v1789 = vunpack.c.l.b16 %v395
    %v1790 = vunpack.c.h.b16 %v395
    %v1791 = vunpack.c.l.b16 %v396
    %v1792 = vunpack.c.h.b16 %v396
    %v1793 = vunpack.c.l.b16 %v397
    %v1794 = vunpack.c.h.b16 %v397
    %v1795 = vunpack.c.l.b16 %v398
    %v1796 = vunpack.c.h.b16 %v398
    %v1797 = vunpack.c.l.b16 %v399
    %v1798 = vunpack.c.h.b16 %v399
    %v1799 = vunpack.c.l.b16 %v400
    %v1800 = vunpack.c.h.b16 %v400
    %v1801 = vunpack.c.l.b16 %v401
    %v1802 = vunpack.c.h.b16 %v401
    %v1803 = vunpack.c.l.b16 %v402
    %v1804 = vunpack.c.h.b16 %v402
    %v1805 = vunpack.c.l.b16 %v403
    %v1806 = vunpack.c.h.b16 %v403
    %v1807 = vunpack.c.l.b16 %v404
    %v1808 = vunpack.c.h.b16 %v404
    %v1809 = vunpack.c.l.b16 %v405
    %v1810 = vunpack.c.h.b16 %v405
    %v1811 = vunpack.c.l.b16 %v406
    %v1812 = vunpack.c.h.b16 %v406
    %v1813 = vunpack.c.l.b16 %v407
    %v1814 = vunpack.c.h.b16 %v407
    %v1815 = vunpack.c.l.b16 %v408
    %v1816 = vunpack.c.h.b16 %v408
    %v1817 = vunpack.c.l.b16 %v409
    %v1818 = vunpack.c.h.b16 %v409
    %v1819 = vunpack.c.l.b16 %v410
    %v1820 = vunpack.c.h.b16 %v410
    %v1821 = vunpack.c.l.b16 %v411
    %v1822 = vunpack.c.h.b16 %v411
    %v1823 = vunpack.c.l.b16 %v412
    %v1824 = vunpack.c.h.b16 %v412
    %v1825 = vunpack.c.l.b16 %v413
    %v1826 = vunpack.c.h.b16 %v413
    %v1827 = vunpack.c.l.b16 %v414
    %v1828 = vunpack.c.h.b16 %v414
    %v1829 = vunpack.c.l.b16 %v415
    %v1830 = vunpack.c.h.b16 %v415
    %v1831 = vunpack.c.l.b16 %v416
    %v1832 = vunpack.c.h.b16 %v416
    %v1833 = vunpack.c.l.b16 %v417
    %v1834 = vunpack.c.h.b16 %v417
    %v1835 = vunpack.c.l.b16 %v418
    %v1836 = vunpack.c.h.b16 %v418
    %v1837 = vunpack.c.l.b16 %v419
    %v1838 = vunpack.c.h.b16 %v419
    %v1839 = vunpack.c.l.b16 %v420
    %v1840 = vunpack.c.h.b16 %v420
    %v1841 = vunpack.c.l.b16 %v421
    %v1842 = vunpack.c.h.b16 %v421
    %v1843 = vunpack.c.l.b16 %v422
    %v1844 = vunpack.c.h.b16 %v422
    %v1845 = vunpack.c.l.b16 %v423
    %v1846 = vunpack.c.h.b16 %v423
    %v1847 = vunpack.c.l.b16 %v424
    %v1848 = vunpack.c.h.b16 %v424
    %v1849 = vunpack.c.l.b16 %v425
    %v1850 = vunpack.c.h.b16 %v425
    %v1851 = vunpack.c.l.b16 %v426
    %v1852 = vunpack.c.h.b16 %v426
    %v1853 = vunpack.c.l.b16 %v427
    %v1854 = vunpack.c.h.b16 %v427
    %v1855 = vunpack.c.l.b16 %v428
    %v1856 = vunpack.c.h.b16 %v428
    %v1857 = vunpack.c.l.b16 %v429
    %v1858 = vunpack.c.h.b16 %v429
    %v1859 = vunpack.c.l.b16 %v430
    %v1860 = vunpack.c.h.b16 %v430
    %v1861 = vunpack.c.l.b16 %v431
    %v1862 = vunpack.c.h.b16 %v431
    %v1863 = vunpack.c.l.b16 %v432
    %v1864 = vunpack.c.h.b16 %v432
    %v1865 = vunpack.c.l.b16 %v433
    %v1866 = vunpack.c.h.b16 %v433
    %v1867 = vunpack.c.l.b16 %v434
    %v1868 = vunpack.c.h.b16 %v434
    %v1869 = vunpack.c.l.b16 %v435
    %v1870 = vunpack.c.h.b16 %v435
    %v1871 = vunpack.c.l.b16 %v436
    %v1872 = vunpack.c.h.b16 %v436
    %v1873 = vunpack.c.l.b16 %v437
    %v1874 = vunpack.c.h.b16 %v437
    %v1875 = vunpack.c.l.b16 %v438
    %v1876 = vunpack.c.h.b16 %v438
    %v1877 = vunpack.c.l.b16 %v439
    %v1878 = vunpack.c.h.b16 %v439
    %v1879 = vunpack.c.l.b16 %v440
    %v1880 = vunpack.c.h.b16 %v440
    %v1881 = vunpack.c.l.b16 %v441
    %v1882 = vunpack.c.h.b16 %v441
    %v1883 = vunpack.c.l.b16 %v442
    %v1884 = vunpack.c.h.b16 %v442
    %v1885 = vunpack.c.l.b16 %v443
    %v1886 = vunpack.c.h.b16 %v443
    %v1887 = vunpack.c.l.b16 %v444
    %v1888 = vunpack.c.h.b16 %v444
    %v1889 = vunpack.c.l.b16 %v445
    %v1890 = vunpack.c.h.b16 %v445
    %v1891 = vunpack.c.l.b16 %v446
    %v1892 = vunpack.c.h.b16 %v446
    %v1893 = vunpack.c.l.b16 %v447
    %v1894 = vunpack.c.h.b16 %v447
    %v1895 = vunpack.c.l.b16 %v448
    %v1896 = vunpack.c.h.b16 %v448
    %v1897 = vunpack.c.l.b16 %v449
    %v1898 = vunpack.c.h.b16 %v449
    %v1899 = vunpack.c.l.b16 %v450
    %v1900 = vunpack.c.h.b16 %v450
    %v1901 = vunpack.c.l.b16 %v451
    %v1902 = vunpack.c.h.b16 %v451
    %v1903 = vunpack.c.l.b16 %v452
    %v1904 = vunpack.c.h.b16 %v452
    %v1905 = vunpack.c.l.b16 %v453
    %v1906 = vunpack.c.h.b16 %v453
    %v1907 = vunpack.c.l.b16 %v454
    %v1908 = vunpack.c.h.b16 %v454
    %v1909 = vunpack.c.l.b16 %v455
    %v1910 = vunpack.c.h.b16 %v455
    %v1911 = vunpack.c.l.b16 %v456
    %v1912 = vunpack.c.h.b16 %v456
    %v1913 = vunpack.c.l.b16 %v457
    %v1914 = vunpack.c.h.b16 %v457
    %v1915 = vunpack.c.l.b16 %v458
    %v1916 = vunpack.c.h.b16 %v458
    %v1917 = vunpack.c.l.b16 %v459
    %v1918 = vunpack.c.h.b16 %v459
    %v1919 = vpack.c.b16 %v1089, %v1087
    %v1920 = vpack.c.b16 %v1090, %v1088
    %v1921 = vpack.c.b16 %v1093, %v1091
    %v1922 = vpack.c.b16 %v1094, %v1092
    %v1923 = vpack.c.b16 %v1097, %v1095
    %v1924 = vpack.c.b16 %v1098, %v1096
    %v1925 = vpack.c.b16 %v1101, %v1099
    %v1926 = vpack.c.b16 %v1102, %v1100
    %v1927 = vpack.c.b16 %v1105, %v1103
    %v1928 = vpack.c.b16 %v1106, %v1104
    %v1929 = vpack.c.b16 %v1109, %v1107
    %v1930 = vpack.c.b16 %v1110, %v1108
    %v1931 = vpack.c.b16 %v1113, %v1111
    %v1932 = vpack.c.b16 %v1114, %v1112
    %v1933 = vpack.c.b16 %v1117, %v1115
    %v1934 = vpack.c.b16 %v1118, %v1116
    %v1935 = vpack.c.b16 %v1121, %v1119
    %v1936 = vpack.c.b16 %v1122, %v1120
    %v1937 = vpack.c.b16 %v1125, %v1123
    %v1938 = vpack.c.b16 %v1126, %v1124
    %v1939 = vpack.c.b16 %v1129, %v1127
    %v1940 = vpack.c.b16 %v1130, %v1128
    %v1941 = vpack.c.b16 %v1133, %v1131
    %v1942 = vpack.c.b16 %v1134, %v1132
    %v1943 = vpack.c.b16 %v1137, %v1135
    %v1944 = vpack.c.b16 %v1138, %v1136
    %v1945 = vpack.c.b16 %v1141, %v1139
    %v1946 = vpack.c.b16 %v1142, %v1140
    %v1947 = vpack.c.b16 %v1145, %v1143
    %v1948 = vpack.c.b16 %v1146, %v1144
    %v1949 = vpack.c.b16 %v1149, %v1147
    %v1950 = vpack.c.b16 %v1150, %v1148
    %v1951 = vpack.c.b16 %v1153, %v1151
    %v1952 = vpack.c.b16 %v1154, %v1152
    %v1953 = vpack.c.b16 %v1157, %v1155
    %v1954 = vpack.c.b16 %v1158, %v1156
    %v1955 = vpack.c.b16 %v1161, %v1159
    %v1956 = vpack.c.b16 %v1162, %v1160
    %v1957 = vpack.c.b16 %v1165, %v1163
    %v1958 = vpack.c.b16 %v1166, %v1164
    %v1959 = vpack.c.b16 %v1169, %v1167
    %v1960 = vpack.c.b16 %v1170, %v1168
    %v1961 = vpack.c.b16 %v1173, %v1171
    %v1962 = vpack.c.b16 %v1174, %v1172
    %v1963 = vpack.c.b16 %v1177, %v1175
    %v1964 = vpack.c.b16 %v1178, %v1176
    %v1965 = vpack.c.b16 %v1181, %v1179
    %v1966 = vpack.c.b16 %v1182, %v1180
    %v1967 = vpack.c.b16 %v1185, %v1183
    %v1968 = vpack.c.b16 %v1186, %v1184
    %v1969 = vpack.c.b16 %v1189, %v1187
    %v1970 = vpack.c.b16 %v1190, %v1188
    %v1971 = vpack.c.b16 %v1193, %v1191
    %v1972 = vpack.c.b16 %v1194, %v1192
    %v1973 = vpack.c.b16 %v1197, %v1195
    %v1974 = vpack.c.b16 %v1198, %v1196
    %v1975 = vpack.c.b16 %v1201, %v1199
    %v1976 = vpack.c.b16 %v1202, %v1200
    %v1977 = vpack.c.b16 %v1205, %v1203
    %v1978 = vpack.c.b16 %v1206, %v1204
    %v1979 = vpack.c.b16 %v1209, %v1207
    %v1980 = vpack.c.b16 %v1210, %v1208
    %v1981 = vpack.c.b16 %v1213, %v1211
    %v1982 = vpack.c.b16 %v1214, %v1212
    %v1983 = vpack.c.b16 %v1217, %v1215
    %v1984 = vpack.c.b16 %v1218, %v1216
    %v1985 = vpack.c.b16 %v1221, %v1219
    %v1986 = vpack.c.b16 %v1222, %v1220
    %v1987 = vpack.c.b16 %v1225, %v1223
    %v1988 = vpack.c.b16 %v1226, %v1224
    %v1989 = vpack.c.b16 %v1229, %v1227
    %v1990 = vpack.c.b16 %v1230, %v1228
    %v1991 = vpack.c.b16 %v1233, %v1231
    %v1992 = vpack.c.b16 %v1234, %v1232
    %v1993 = vpack.c.b16 %v1237, %v1235
    %v1994 = vpack.c.b16 %v1238, %v1236
    %v1995 = vpack.c.b16 %v1241, %v1239
    %v1996 = vpack.c.b16 %v1242, %v1240
    %v1997 = vpack.c.b16 %v1245, %v1243
    %v1998 = vpack.c.b16 %v1246, %v1244
    %v1999 = vpack.c.b16 %v1249, %v1247
    %v2000 = vpack.c.b16 %v1250, %v1248
    %v2001 = vpack.c.b16 %v1253, %v1251
    %v2002 = vpack.c.b16 %v1254, %v1252
    %v2003 = vpack.c.b16 %v1257, %v1255
    %v2004 = vpack.c.b16 %v1258, %v1256
    %v2005 = vpack.c.b16 %v1261, %v1259
    %v2006 = vpack.c.b16 %v1262, %v1260
    %v2007 = vpack.c.b16 %v1265, %v1263
    %v2008 = vpack.c.b16 %v1266, %v1264
    %v2009 = vpack.c.b16 %v1269, %v1267
    %v2010 = vpack.c.b16 %v1270, %v1268
    %v2011 = vpack.c.b16 %v1273, %v1271
    %v2012 = vpack.c.b16 %v1274, %v1272
    %v2013 = vpack.c.b16 %v1277, %v1275
    %v2014 = vpack.c.b16 %v1278, %v1276
    %v2015 = vpack.c.b16 %v1281, %v1279
    %v2016 = vpack.c.b16 %v1282, %v1280
    %v2017 = vpack.c.b16 %v1285, %v1283
    %v2018 = vpack.c.b16 %v1286, %v1284
    %v2019 = vpack.c.b16 %v1289, %v1287
    %v2020 = vpack.c.b16 %v1290, %v1288
    %v2021 = vpack.c.b16 %v1293, %v1291
    %v2022 = vpack.c.b16 %v1294, %v1292
    %v2023 = vpack.c.b16 %v1297, %v1295
    %v2024 = vpack.c.b16 %v1298, %v1296
    %v2025 = vpack.c.b16 %v1301, %v1299
    %v2026 = vpack.c.b16 %v1302, %v1300
    %v2027 = vpack.c.b16 %v1305, %v1303
    %v2028 = vpack.c.b16 %v1306, %v1304
    %v2029 = vpack.c.b16 %v1309, %v1307
    %v2030 = vpack.c.b16 %v1310, %v1308
    %v2031 = vpack.c.b16 %v1313, %v1311
    %v2032 = vpack.c.b16 %v1314, %v1312
    %v2033 = vpack.c.b16 %v1317, %v1315
    %v2034 = vpack.c.b16 %v1318, %v1316
    %v2035 = vpack.c.b16 %v1321, %v1319
    %v2036 = vpack.c.b16 %v1322, %v1320
    %v2037 = vpack.c.b16 %v1325, %v1323
    %v2038 = vpack.c.b16 %v1326, %v1324
    %v2039 = vpack.c.b16 %v1329, %v1327
    %v2040 = vpack.c.b16 %v1330, %v1328
    %v2041 = vpack.c.b16 %v1333, %v1331
    %v2042 = vpack.c.b16 %v1334, %v1332
    %v2043 = vpack.c.b16 %v1337, %v1335
    %v2044 = vpack.c.b16 %v1338, %v1336
    %v2045 = vpack.c.b16 %v1341, %v1339
    %v2046 = vpack.c.b16 %v1342, %v1340
    %v2047 = vpack.c.b16 %v1345, %v1343
    %v2048 = vpack.c.b16 %v1346, %v1344
    %v2049 = vpack.c.b16 %v1349, %v1347
    %v2050 = vpack.c.b16 %v1350, %v1348
    %v2051 = vpack.c.b16 %v1353, %v1351
    %v2052 = vpack.c.b16 %v1354, %v1352
    %v2053 = vpack.c.b16 %v1357, %v1355
    %v2054 = vpack.c.b16 %v1358, %v1356
    %v2055 = vpack.c.b16 %v1361, %v1359
    %v2056 = vpack.c.b16 %v1362, %v1360
    %v2057 = vpack.c.b16 %v1365, %v1363
    %v2058 = vpack.c.b16 %v1366, %v1364
    %v2059 = vpack.c.b16 %v1369, %v1367
    %v2060 = vpack.c.b16 %v1370, %v1368
    %v2061 = vpack.c.b16 %v1373, %v1371
    %v2062 = vpack.c.b16 %v1374, %v1372
    %v2063 = vpack.c.b16 %v1377, %v1375
    %v2064 = vpack.c.b16 %v1378, %v1376
    %v2065 = vpack.c.b16 %v1381, %v1379
    %v2066 = vpack.c.b16 %v1382, %v1380
    %v2067 = vpack.c.b16 %v1385, %v1383
    %v2068 = vpack.c.b16 %v1386, %v1384
    %v2069 = vpack.c.b16 %v1389, %v1387
    %v2070 = vpack.c.b16 %v1390, %v1388
    %v2071 = vpack.c.b16 %v1393, %v1391
    %v2072 = vpack.c.b16 %v1394, %v1392
    %v2073 = vpack.c.b16 %v1397, %v1395
    %v2074 = vpack.c.b16 %v1398, %v1396
    %v2075 = vpack.c.b16 %v1401, %v1399
    %v2076 = vpack.c.b16 %v1402, %v1400
    %v2077 = vpack.c.b16 %v1405, %v1403
    %v2078 = vpack.c.b16 %v1406, %v1404
    %v2079 = vpack.c.b16 %v1409, %v1407
    %v2080 = vpack.c.b16 %v1410, %v1408
    %v2081 = vpack.c.b16 %v1413, %v1411
    %v2082 = vpack.c.b16 %v1414, %v1412
    %v2083 = vpack.c.b16 %v1417, %v1415
    %v2084 = vpack.c.b16 %v1418, %v1416
    %v2085 = vpack.c.b16 %v1421, %v1419
    %v2086 = vpack.c.b16 %v1422, %v1420
    %v2087 = vpack.c.b16 %v1425, %v1423
    %v2088 = vpack.c.b16 %v1426, %v1424
    %v2089 = vpack.c.b16 %v1429, %v1427
    %v2090 = vpack.c.b16 %v1430, %v1428
    %v2091 = vpack.c.b16 %v1433, %v1431
    %v2092 = vpack.c.b16 %v1434, %v1432
    %v2093 = vpack.c.b16 %v1437, %v1435
    %v2094 = vpack.c.b16 %v1438, %v1436
    %v2095 = vpack.c.b16 %v1441, %v1439
    %v2096 = vpack.c.b16 %v1442, %v1440
    %v2097 = vpack.c.b16 %v1445, %v1443
    %v2098 = vpack.c.b16 %v1446, %v1444
    %v2099 = vpack.c.b16 %v1449, %v1447
    %v2100 = vpack.c.b16 %v1450, %v1448
    %v2101 = vpack.c.b16 %v1453, %v1451
    %v2102 = vpack.c.b16 %v1454, %v1452
    %v2103 = vpack.c.b16 %v1457, %v1455
    %v2104 = vpack.c.b16 %v1458, %v1456
    %v2105 = vpack.c.b16 %v1461, %v1459
    %v2106 = vpack.c.b16 %v1462, %v1460
    %v2107 = vpack.c.b16 %v1465, %v1463
    %v2108 = vpack.c.b16 %v1466, %v1464
    %v2109 = vpack.c.b16 %v1469, %v1467
    %v2110 = vpack.c.b16 %v1470, %v1468
    %v2111 = vpack.c.b16 %v1473, %v1471
    %v2112 = vpack.c.b16 %v1474, %v1472
    %v2113 = vpack.c.b16 %v1477, %v1475
    %v2114 = vpack.c.b16 %v1478, %v1476
    %v2115 = vpack.c.b16 %v1481, %v1479
    %v2116 = vpack.c.b16 %v1482, %v1480
    %v2117 = vpack.c.b16 %v1485, %v1483
    %v2118 = vpack.c.b16 %v1486, %v1484
    %v2119 = vpack.c.b16 %v1489, %v1487
    %v2120 = vpack.c.b16 %v1490, %v1488
    %v2121 = vpack.c.b16 %v1493, %v1491
    %v2122 = vpack.c.b16 %v1494, %v1492
    %v2123 = vpack.c.b16 %v1497, %v1495
    %v2124 = vpack.c.b16 %v1498, %v1496
    %v2125 = vpack.c.b16 %v1501, %v1499
    %v2126 = vpack.c.b16 %v1502, %v1500
    %v2127 = vpack.c.b16 %v1505, %v1503
    %v2128 = vpack.c.b16 %v1506, %v1504
    %v2129 = vpack.c.b16 %v1509, %v1507
    %v2130 = vpack.c.b16 %v1510, %v1508
    %v2131 = vpack.c.b16 %v1513, %v1511
    %v2132 = vpack.c.b16 %v1514, %v1512
    %v2133 = vpack.c.b16 %v1517, %v1515
    %v2134 = vpack.c.b16 %v1518, %v1516
    %v2135 = vpack.c.b16 %v1521, %v1519
    %v2136 = vpack.c.b16 %v1522, %v1520
    %v2137 = vpack.c.b16 %v1525, %v1523
    %v2138 = vpack.c.b16 %v1526, %v1524
    %v2139 = vpack.c.b16 %v1529, %v1527
    %v2140 = vpack.c.b16 %v1530, %v1528
    %v2141 = vpack.c.b16 %v1533, %v1531
    %v2142 = vpack.c.b16 %v1534, %v1532
    %v2143 = vpack.c.b16 %v1537, %v1535
    %v2144 = vpack.c.b16 %v1538, %v1536
    %v2145 = vpack.c.b16 %v1541, %v1539
    %v2146 = vpack.c.b16 %v1542, %v1540
    %v2147 = vpack.c.b16 %v1545, %v1543
    %v2148 = vpack.c.b16 %v1546, %v1544
    %v2149 = vpack.c.b16 %v1549, %v1547
    %v2150 = vpack.c.b16 %v1550, %v1548
    %v2151 = vpack.c.b16 %v1553, %v1551
    %v2152 = vpack.c.b16 %v1554, %v1552
    %v2153 = vpack.c.b16 %v1557, %v1555
    %v2154 = vpack.c.b16 %v1558, %v1556
    %v2155 = vpack.c.b16 %v1561, %v1559
    %v2156 = vpack.c.b16 %v1562, %v1560
    %v2157 = vpack.c.b16 %v1565, %v1563
    %v2158 = vpack.c.b16 %v1566, %v1564
    %v2159 = vpack.c.b16 %v1569, %v1567
    %v2160 = vpack.c.b16 %v1570, %v1568
    %v2161 = vpack.c.b16 %v1573, %v1571
    %v2162 = vpack.c.b16 %v1574, %v1572
    %v2163 = vpack.c.b16 %v1577, %v1575
    %v2164 = vpack.c.b16 %v1578, %v1576
    %v2165 = vpack.c.b16 %v1581, %v1579
    %v2166 = vpack.c.b16 %v1582, %v1580
    %v2167 = vpack.c.b16 %v1585, %v1583
    %v2168 = vpack.c.b16 %v1586, %v1584
    %v2169 = vpack.c.b16 %v1589, %v1587
    %v2170 = vpack.c.b16 %v1590, %v1588
    %v2171 = vpack.c.b16 %v1593, %v1591
    %v2172 = vpack.c.b16 %v1594, %v1592
    %v2173 = vpack.c.b16 %v1597, %v1595
    %v2174 = vpack.c.b16 %v1598, %v1596
    %v2175 = vpack.c.b16 %v1601, %v1599
    %v2176 = vpack.c.b16 %v1602, %v1600
    %v2177 = vpack.c.b16 %v1605, %v1603
    %v2178 = vpack.c.b16 %v1606, %v1604
    %v2179 = vpack.c.b16 %v1609, %v1607
    %v2180 = vpack.c.b16 %v1610, %v1608
    %v2181 = vpack.c.b16 %v1613, %v1611
    %v2182 = vpack.c.b16 %v1614, %v1612
    %v2183 = vpack.c.b16 %v1617, %v1615
    %v2184 = vpack.c.b16 %v1618, %v1616
    %v2185 = vpack.c.b16 %v1621, %v1619
    %v2186 = vpack.c.b16 %v1622, %v1620
    %v2187 = vpack.c.b16 %v1625, %v1623
    %v2188 = vpack.c.b16 %v1626, %v1624
    %v2189 = vpack.c.b16 %v1629, %v1627
    %v2190 = vpack.c.b16 %v1630, %v1628
    %v2191 = vpack.c.b16 %v1633, %v1631
    %v2192 = vpack.c.b16 %v1634, %v1632
    %v2193 = vpack.c.b16 %v1637, %v1635
    %v2194 = vpack.c.b16 %v1638, %v1636
    %v2195 = vpack.c.b16 %v1641, %v1639
    %v2196 = vpack.c.b16 %v1642, %v1640
    %v2197 = vpack.c.b16 %v1645, %v1643
    %v2198 = vpack.c.b16 %v1646, %v1644
    %v2199 = vpack.c.b16 %v1649, %v1647
    %v2200 = vpack.c.b16 %v1650, %v1648
    %v2201 = vpack.c.b16 %v1653, %v1651
    %v2202 = vpack.c.b16 %v1654, %v1652
    %v2203 = vpack.c.b16 %v1657, %v1655
    %v2204 = vpack.c.b16 %v1658, %v1656
    %v2205 = vpack.c.b16 %v1661, %v1659
    %v2206 = vpack.c.b16 %v1662, %v1660
    %v2207 = vpack.c.b16 %v1665, %v1663
    %v2208 = vpack.c.b16 %v1666, %v1664
    %v2209 = vpack.c.b16 %v1669, %v1667
    %v2210 = vpack.c.b16 %v1670, %v1668
    %v2211 = vpack.c.b16 %v1673, %v1671
    %v2212 = vpack.c.b16 %v1674, %v1672
    %v2213 = vpack.c.b16 %v1677, %v1675
    %v2214 = vpack.c.b16 %v1678, %v1676
    %v2215 = vpack.c.b16 %v1681, %v1679
    %v2216 = vpack.c.b16 %v1682, %v1680
    %v2217 = vpack.c.b16 %v1685, %v1683
    %v2218 = vpack.c.b16 %v1686, %v1684
    %v2219 = vpack.c.b16 %v1689, %v1687
    %v2220 = vpack.c.b16 %v1690, %v1688
    %v2221 = vpack.c.b16 %v1693, %v1691
    %v2222 = vpack.c.b16 %v1694, %v1692
    %v2223 = vpack.c.b16 %v1697, %v1695
    %v2224 = vpack.c.b16 %v1698, %v1696
    %v2225 = vpack.c.b16 %v1701, %v1699
    %v2226 = vpack.c.b16 %v1702, %v1700
    %v2227 = vpack.c.b16 %v1705, %v1703
    %v2228 = vpack.c.b16 %v1706, %v1704
    %v2229 = vpack.c.b16 %v1709, %v1707
    %v2230 = vpack.c.b16 %v1710, %v1708
    %v2231 = vpack.c.b16 %v1713, %v1711
    %v2232 = vpack.c.b16 %v1714, %v1712
    %v2233 = vpack.c.b16 %v1717, %v1715
    %v2234 = vpack.c.b16 %v1718, %v1716
    %v2235 = vpack.c.b16 %v1721, %v1719
    %v2236 = vpack.c.b16 %v1722, %v1720
    %v2237 = vpack.c.b16 %v1725, %v1723
    %v2238 = vpack.c.b16 %v1726, %v1724
    %v2239 = vpack.c.b16 %v1729, %v1727
    %v2240 = vpack.c.b16 %v1730, %v1728
    %v2241 = vpack.c.b16 %v1733, %v1731
    %v2242 = vpack.c.b16 %v1734, %v1732
    %v2243 = vpack.c.b16 %v1737, %v1735
    %v2244 = vpack.c.b16 %v1738, %v1736
    %v2245 = vpack.c.b16 %v1741, %v1739
    %v2246 = vpack.c.b16 %v1742, %v1740
    %v2247 = vpack.c.b16 %v1745, %v1743
    %v2248 = vpack.c.b16 %v1746, %v1744
    %v2249 = vpack.c.b16 %v1749, %v1747
    %v2250 = vpack.c.b16 %v1750, %v1748
    %v2251 = vpack.c.b16 %v1753, %v1751
    %v2252 = vpack.c.b16 %v1754, %v1752
    %v2253 = vpack.c.b16 %v1757, %v1755
    %v2254 = vpack.c.b16 %v1758, %v1756
    %v2255 = vpack.c.b16 %v1761, %v1759
    %v2256 = vpack.c.b16 %v1762, %v1760
    %v2257 = vpack.c.b16 %v1765, %v1763
    %v2258 = vpack.c.b16 %v1766, %v1764
    %v2259 = vpack.c.b16 %v1769, %v1767
    %v2260 = vpack.c.b16 %v1770, %v1768
    %v2261 = vpack.c.b16 %v1773, %v1771
    %v2262 = vpack.c.b16 %v1774, %v1772
    %v2263 = vpack.c.b16 %v1777, %v1775
    %v2264 = vpack.c.b16 %v1778, %v1776
    %v2265 = vpack.c.b16 %v1781, %v1779
    %v2266 = vpack.c.b16 %v1782, %v1780
    %v2267 = vpack.c.b16 %v1785, %v1783
    %v2268 = vpack.c.b16 %v1786, %v1784
    %v2269 = vpack.c.b16 %v1789, %v1787
    %v2270 = vpack.c.b16 %v1790, %v1788
    %v2271 = vpack.c.b16 %v1793, %v1791
    %v2272 = vpack.c.b16 %v1794, %v1792
    %v2273 = vpack.c.b16 %v1797, %v1795
    %v2274 = vpack.c.b16 %v1798, %v1796
    %v2275 = vpack.c.b16 %v1801, %v1799
    %v2276 = vpack.c.b16 %v1802, %v1800
    %v2277 = vpack.c.b16 %v1805, %v1803
    %v2278 = vpack.c.b16 %v1806, %v1804
    %v2279 = vpack.c.b16 %v1809, %v1807
    %v2280 = vpack.c.b16 %v1810, %v1808
    %v2281 = vpack.c.b16 %v1813, %v1811
    %v2282 = vpack.c.b16 %v1814, %v1812
    %v2283 = vpack.c.b16 %v1817, %v1815
    %v2284 = vpack.c.b16 %v1818, %v1816
    %v2285 = vpack.c.b16 %v1821, %v1819
    %v2286 = vpack.c.b16 %v1822, %v1820
    %v2287 = vpack.c.b16 %v1825, %v1823
    %v2288 = vpack.c.b16 %v1826, %v1824
    %v2289 = vpack.c.b16 %v1829, %v1827
    %v2290 = vpack.c.b16 %v1830, %v1828
    %v2291 = vpack.c.b16 %v1833, %v1831
    %v2292 = vpack.c.b16 %v1834, %v1832
    %v2293 = vpack.c.b16 %v1837, %v1835
    %v2294 = vpack.c.b16 %v1838, %v1836
    %v2295 = vpack.c.b16 %v1841, %v1839
    %v2296 = vpack.c.b16 %v1842, %v1840
    %v2297 = vpack.c.b16 %v1845, %v1843
    %v2298 = vpack.c.b16 %v1846, %v1844
    %v2299 = vpack.c.b16 %v1849, %v1847
    %v2300 = vpack.c.b16 %v1850, %v1848
    %v2301 = vpack.c.b16 %v1853, %v1851
    %v2302 = vpack.c.b16 %v1854, %v1852
    %v2303 = vpack.c.b16 %v1857, %v1855
    %v2304 = vpack.c.b16 %v1858, %v1856
    %v2305 = vpack.c.b16 %v1861, %v1859
    %v2306 = vpack.c.b16 %v1862, %v1860
    %v2307 = vpack.c.b16 %v1865, %v1863
    %v2308 = vpack.c.b16 %v1866, %v1864
    %v2309 = vpack.c.b16 %v1869, %v1867
    %v2310 = vpack.c.b16 %v1870, %v1868
    %v2311 = vpack.c.b16 %v1873, %v1871
    %v2312 = vpack.c.b16 %v1874, %v1872
    %v2313 = vpack.c.b16 %v1877, %v1875
    %v2314 = vpack.c.b16 %v1878, %v1876
    %v2315 = vpack.c.b16 %v1881, %v1879
    %v2316 = vpack.c.b16 %v1882, %v1880
    %v2317 = vpack.c.b16 %v1885, %v1883
    %v2318 = vpack.c.b16 %v1886, %v1884
    %v2319 = vpack.c.b16 %v1889, %v1887
    %v2320 = vpack.c.b16 %v1890, %v1888
    %v2321 = vpack.c.b16 %v1893, %v1891
    %v2322 = vpack.c.b16 %v1894, %v1892
    %v2323 = vpack.c.b16 %v1897, %v1895
    %v2324 = vpack.c.b16 %v1898, %v1896
    %v2325 = vpack.c.b16 %v1901, %v1899
    %v2326 = vpack.c.b16 %v1902, %v1900
    %v2327 = vpack.c.b16 %v1905, %v1903
    %v2328 = vpack.c.b16 %v1906, %v1904
    %v2329 = vpack.c.b16 %v1909, %v1907
    %v2330 = vpack.c.b16 %v1910, %v1908
    %v2331 = vpack.c.b16 %v1913, %v1911
    %v2332 = vpack.c.b16 %v1914, %v1912
    %v2333 = vpack.c.b16 %v1917, %v1915
    %v2334 = vpack.c.b16 %v1918, %v1916
    %2751 = vmatprep.subr.bf16.mxu0 %v1920
    %2752 = vmatpush1.bf16.msra.mxu0 %v1919
    %2753 = vmatprep.subr.bf16.mxu0 %v1922
    %2754 = vmatpush1.bf16.msra.mxu0 %v1921
    %2755 = vmatprep.subr.bf16.mxu0 %v1924
    %2756 = vmatpush1.bf16.msra.mxu0 %v1923
    %2757 = vmatprep.subr.bf16.mxu0 %v1926
    %2758 = vmatpush1.bf16.msra.mxu0 %v1925
    %2759 = vmatprep.subr.bf16.mxu0 %v1928
    %2760 = vmatpush1.bf16.msra.mxu0 %v1927
    %2761 = vmatprep.subr.bf16.mxu0 %v1930
    %2762 = vmatpush1.bf16.msra.mxu0 %v1929
    %2763 = vmatprep.subr.bf16.mxu0 %v1932
    %2764 = vmatpush1.bf16.msra.mxu0 %v1931
    %2765 = vmatprep.subr.bf16.mxu0 %v1934
    %2766 = vmatpush1.bf16.msra.mxu0 %v1933
    %2767 = vmatprep.subr.bf16.mxu0 %v1936
    %2768 = vmatpush1.bf16.msra.mxu0 %v1935
    %2769 = vmatprep.subr.bf16.mxu0 %v1938
    %2770 = vmatpush1.bf16.msra.mxu0 %v1937
    %2771 = vmatprep.subr.bf16.mxu0 %v1940
    %2772 = vmatpush1.bf16.msra.mxu0 %v1939
    %2773 = vmatprep.subr.bf16.mxu0 %v1942
    %2774 = vmatpush1.bf16.msra.mxu0 %v1941
    %2775 = vmatprep.subr.bf16.mxu0 %v1944
    %2776 = vmatpush1.bf16.msra.mxu0 %v1943
    %2777 = vmatprep.subr.bf16.mxu0 %v1946
    %2778 = vmatpush1.bf16.msra.mxu0 %v1945
    %2779 = vmatprep.subr.bf16.mxu0 %v1948
    %2780 = vmatpush1.bf16.msra.mxu0 %v1947
    %2781 = vmatprep.subr.bf16.mxu0 %v1950
    %2782 = vmatpush1.bf16.msra.mxu0 %v1949
    %2783 = vmatprep.mubr.bf16.mxu0 %v513
    %2784 = vmatmul.mubr.bf16.gmra.mrb[0].mxu0 %v499
    %v2785 = vpop.f32.mrb[0].mxu0
    %v2786 = vadd.f32 %v465, %v2785
    %v2787 = vpop.f32.mrb[0].mxu0
    %v2788 = vadd.f32 %v469, %v2787
    %v2789 = vpop.f32.mrb[0].mxu0
    %v2790 = vpop.f32.mrb[0].mxu0
    %2791 = vdwg.mxu0
    %2792 = vmatprep.subr.bf16.mxu0 %v1952
    %2793 = vmatpush1.bf16.msra.mxu0 %v1951
    %2794 = vmatprep.subr.bf16.mxu0 %v1954
    %2795 = vmatpush1.bf16.msra.mxu0 %v1953
    %2796 = vmatprep.subr.bf16.mxu0 %v1956
    %2797 = vmatpush1.bf16.msra.mxu0 %v1955
    %2798 = vmatprep.subr.bf16.mxu0 %v1958
    %2799 = vmatpush1.bf16.msra.mxu0 %v1957
    %2800 = vmatprep.subr.bf16.mxu0 %v1960
    %2801 = vmatpush1.bf16.msra.mxu0 %v1959
    %2802 = vmatprep.subr.bf16.mxu0 %v1962
    %2803 = vmatpush1.bf16.msra.mxu0 %v1961
    %2804 = vmatprep.subr.bf16.mxu0 %v1964
    %2805 = vmatpush1.bf16.msra.mxu0 %v1963
    %2806 = vmatprep.subr.bf16.mxu0 %v1966
    %2807 = vmatpush1.bf16.msra.mxu0 %v1965
    %2808 = vmatprep.subr.bf16.mxu0 %v1968
    %2809 = vmatpush1.bf16.msra.mxu0 %v1967
    %2810 = vmatprep.subr.bf16.mxu0 %v1970
    %2811 = vmatpush1.bf16.msra.mxu0 %v1969
    %2812 = vmatprep.subr.bf16.mxu0 %v1972
    %2813 = vmatpush1.bf16.msra.mxu0 %v1971
    %2814 = vmatprep.subr.bf16.mxu0 %v1974
    %2815 = vmatpush1.bf16.msra.mxu0 %v1973
    %2816 = vmatprep.subr.bf16.mxu0 %v1976
    %2817 = vmatpush1.bf16.msra.mxu0 %v1975
    %2818 = vmatprep.subr.bf16.mxu0 %v1978
    %2819 = vmatpush1.bf16.msra.mxu0 %v1977
    %2820 = vmatprep.subr.bf16.mxu0 %v1980
    %2821 = vmatpush1.bf16.msra.mxu0 %v1979
    %2822 = vmatprep.subr.bf16.mxu0 %v1982
    %2823 = vmatpush1.bf16.msra.mxu0 %v1981
    %2824 = vmatprep.mubr.bf16.mxu0 %v523
    %2825 = vmatmul.mubr.bf16.gmra.mrb[0].mxu0 %v521
    %v2826 = vpop.f32.mrb[0].mxu0
    %v2827 = vadd.f32 %v2786, %v2826
    %v2828 = vpop.f32.mrb[0].mxu0
    %v2829 = vadd.f32 %v2788, %v2828
    %v2830 = vpop.f32.mrb[0].mxu0
    %v2831 = vpop.f32.mrb[0].mxu0
    %2832 = vdwg.mxu0
    %2833 = vmatprep.subr.bf16.mxu0 %v1984
    %2834 = vmatpush1.bf16.msra.mxu0 %v1983
    %2835 = vmatprep.subr.bf16.mxu0 %v1986
    %2836 = vmatpush1.bf16.msra.mxu0 %v1985
    %2837 = vmatprep.subr.bf16.mxu0 %v1988
    %2838 = vmatpush1.bf16.msra.mxu0 %v1987
    %2839 = vmatprep.subr.bf16.mxu0 %v1990
    %2840 = vmatpush1.bf16.msra.mxu0 %v1989
    %2841 = vmatprep.subr.bf16.mxu0 %v1992
    %2842 = vmatpush1.bf16.msra.mxu0 %v1991
    %2843 = vmatprep.subr.bf16.mxu0 %v1994
    %2844 = vmatpush1.bf16.msra.mxu0 %v1993
    %2845 = vmatprep.subr.bf16.mxu0 %v1996
    %2846 = vmatpush1.bf16.msra.mxu0 %v1995
    %2847 = vmatprep.subr.bf16.mxu0 %v1998
    %2848 = vmatpush1.bf16.msra.mxu0 %v1997
    %2849 = vmatprep.subr.bf16.mxu0 %v2000
    %2850 = vmatpush1.bf16.msra.mxu0 %v1999
    %2851 = vmatprep.subr.bf16.mxu0 %v2002
    %2852 = vmatpush1.bf16.msra.mxu0 %v2001
    %2853 = vmatprep.subr.bf16.mxu0 %v2004
    %2854 = vmatpush1.bf16.msra.mxu0 %v2003
    %2855 = vmatprep.subr.bf16.mxu0 %v2006
    %2856 = vmatpush1.bf16.msra.mxu0 %v2005
    %2857 = vmatprep.subr.bf16.mxu0 %v2008
    %2858 = vmatpush1.bf16.msra.mxu0 %v2007
    %2859 = vmatprep.subr.bf16.mxu0 %v2010
    %2860 = vmatpush1.bf16.msra.mxu0 %v2009
    %2861 = vmatprep.subr.bf16.mxu0 %v2012
    %2862 = vmatpush1.bf16.msra.mxu0 %v2011
    %2863 = vmatprep.subr.bf16.mxu0 %v2014
    %2864 = vmatpush1.bf16.msra.mxu0 %v2013
    %2865 = vmatprep.mubr.bf16.mxu0 %v520
    %2866 = vmatmul.mubr.bf16.gmra.mrb[0].mxu0 %v506
    %v2867 = vpop.f32.mrb[0].mxu0
    %v2868 = vadd.f32 %v2827, %v2867
    %v2869 = vpop.f32.mrb[0].mxu0
    %v2870 = vadd.f32 %v2829, %v2869
    %v2871 = vpop.f32.mrb[0].mxu0
    %v2872 = vpop.f32.mrb[0].mxu0
    %2873 = vdwg.mxu0
    %2874 = vmatprep.subr.bf16.mxu0 %v2016
    %2875 = vmatpush1.bf16.msra.mxu0 %v2015
    %2876 = vmatprep.subr.bf16.mxu0 %v2018
    %2877 = vmatpush1.bf16.msra.mxu0 %v2017
    %2878 = vmatprep.subr.bf16.mxu0 %v2020
    %2879 = vmatpush1.bf16.msra.mxu0 %v2019
    %2880 = vmatprep.subr.bf16.mxu0 %v2022
    %2881 = vmatpush1.bf16.msra.mxu0 %v2021
    %2882 = vmatprep.subr.bf16.mxu0 %v2024
    %2883 = vmatpush1.bf16.msra.mxu0 %v2023
    %2884 = vmatprep.subr.bf16.mxu0 %v2026
    %2885 = vmatpush1.bf16.msra.mxu0 %v2025
    %2886 = vmatprep.subr.bf16.mxu0 %v2028
    %2887 = vmatpush1.bf16.msra.mxu0 %v2027
    %2888 = vmatprep.subr.bf16.mxu0 %v2030
    %2889 = vmatpush1.bf16.msra.mxu0 %v2029
    %2890 = vmatprep.subr.bf16.mxu0 %v2032
    %2891 = vmatpush1.bf16.msra.mxu0 %v2031
    %2892 = vmatprep.subr.bf16.mxu0 %v2034
    %2893 = vmatpush1.bf16.msra.mxu0 %v2033
    %2894 = vmatprep.subr.bf16.mxu0 %v2036
    %2895 = vmatpush1.bf16.msra.mxu0 %v2035
    %2896 = vmatprep.subr.bf16.mxu0 %v2038
    %2897 = vmatpush1.bf16.msra.mxu0 %v2037
    %2898 = vmatprep.subr.bf16.mxu0 %v2040
    %2899 = vmatpush1.bf16.msra.mxu0 %v2039
    %2900 = vmatprep.subr.bf16.mxu0 %v2042
    %2901 = vmatpush1.bf16.msra.mxu0 %v2041
    %2902 = vmatprep.subr.bf16.mxu0 %v2044
    %2903 = vmatpush1.bf16.msra.mxu0 %v2043
    %2904 = vmatprep.subr.bf16.mxu0 %v2046
    %2905 = vmatpush1.bf16.msra.mxu0 %v2045
    %2906 = vmatprep.mubr.bf16.mxu0 %v524
    %2907 = vmatmul.mubr.bf16.gmra.mrb[0].mxu0 %v522
    %v2908 = vpop.f32.mrb[0].mxu0
    %v2909 = vadd.f32 %v2868, %v2908
    %v2910 = vpop.f32.mrb[0].mxu0
    %v2911 = vadd.f32 %v2870, %v2910
    %v2912 = vpop.f32.mrb[0].mxu0
    %v2913 = vpop.f32.mrb[0].mxu0
    %2914 = vdwg.mxu0
    %2915 = vmatprep.subr.bf16.mxu0 %v2048
    %2916 = vmatpush1.bf16.msra.mxu0 %v2047
    %2917 = vmatprep.subr.bf16.mxu0 %v2050
    %2918 = vmatpush1.bf16.msra.mxu0 %v2049
    %2919 = vmatprep.subr.bf16.mxu0 %v2052
    %2920 = vmatpush1.bf16.msra.mxu0 %v2051
    %2921 = vmatprep.subr.bf16.mxu0 %v2054
    %2922 = vmatpush1.bf16.msra.mxu0 %v2053
    %2923 = vmatprep.subr.bf16.mxu0 %v2056
    %2924 = vmatpush1.bf16.msra.mxu0 %v2055
    %2925 = vmatprep.subr.bf16.mxu0 %v2058
    %2926 = vmatpush1.bf16.msra.mxu0 %v2057
    %2927 = vmatprep.subr.bf16.mxu0 %v2060
    %2928 = vmatpush1.bf16.msra.mxu0 %v2059
    %2929 = vmatprep.subr.bf16.mxu0 %v2062
    %2930 = vmatpush1.bf16.msra.mxu0 %v2061
    %2931 = vmatprep.subr.bf16.mxu0 %v2064
    %2932 = vmatpush1.bf16.msra.mxu0 %v2063
    %2933 = vmatprep.subr.bf16.mxu0 %v2066
    %2934 = vmatpush1.bf16.msra.mxu0 %v2065
    %2935 = vmatprep.subr.bf16.mxu0 %v2068
    %2936 = vmatpush1.bf16.msra.mxu0 %v2067
    %2937 = vmatprep.subr.bf16.mxu0 %v2070
    %2938 = vmatpush1.bf16.msra.mxu0 %v2069
    %2939 = vmatprep.subr.bf16.mxu0 %v2072
    %2940 = vmatpush1.bf16.msra.mxu0 %v2071
    %2941 = vmatprep.subr.bf16.mxu0 %v2074
    %2942 = vmatpush1.bf16.msra.mxu0 %v2073
    %2943 = vmatprep.subr.bf16.mxu0 %v2076
    %2944 = vmatpush1.bf16.msra.mxu0 %v2075
    %2945 = vmatprep.subr.bf16.mxu0 %v2078
    %2946 = vmatpush1.bf16.msra.mxu0 %v2077
    %2947 = vmatprep.mubr.bf16.mxu0 %v562
    %2948 = vmatmul.mubr.bf16.gmra.mrb[0].mxu0 %v548
    %v2949 = vpop.f32.mrb[0].mxu0
    %v2950 = vadd.f32 %v2909, %v2949
    %v2951 = vpop.f32.mrb[0].mxu0
    %v2952 = vadd.f32 %v2911, %v2951
    %v2953 = vpop.f32.mrb[0].mxu0
    %v2954 = vpop.f32.mrb[0].mxu0
    %2955 = vdwg.mxu0
    %2956 = vmatprep.subr.bf16.mxu0 %v2080
    %2957 = vmatpush1.bf16.msra.mxu0 %v2079
    %2958 = vmatprep.subr.bf16.mxu0 %v2082
    %2959 = vmatpush1.bf16.msra.mxu0 %v2081
    %2960 = vmatprep.subr.bf16.mxu0 %v2084
    %2961 = vmatpush1.bf16.msra.mxu0 %v2083
    %2962 = vmatprep.subr.bf16.mxu0 %v2086
    %2963 = vmatpush1.bf16.msra.mxu0 %v2085
    %2964 = vmatprep.subr.bf16.mxu0 %v2088
    %2965 = vmatpush1.bf16.msra.mxu0 %v2087
    %2966 = vmatprep.subr.bf16.mxu0 %v2090
    %2967 = vmatpush1.bf16.msra.mxu0 %v2089
    %2968 = vmatprep.subr.bf16.mxu0 %v2092
    %2969 = vmatpush1.bf16.msra.mxu0 %v2091
    %2970 = vmatprep.subr.bf16.mxu0 %v2094
    %2971 = vmatpush1.bf16.msra.mxu0 %v2093
    %2972 = vmatprep.subr.bf16.mxu0 %v2096
    %2973 = vmatpush1.bf16.msra.mxu0 %v2095
    %2974 = vmatprep.subr.bf16.mxu0 %v2098
    %2975 = vmatpush1.bf16.msra.mxu0 %v2097
    %2976 = vmatprep.subr.bf16.mxu0 %v2100
    %2977 = vmatpush1.bf16.msra.mxu0 %v2099
    %2978 = vmatprep.subr.bf16.mxu0 %v2102
    %2979 = vmatpush1.bf16.msra.mxu0 %v2101
    %2980 = vmatprep.subr.bf16.mxu0 %v2104
    %2981 = vmatpush1.bf16.msra.mxu0 %v2103
    %2982 = vmatprep.subr.bf16.mxu0 %v2106
    %2983 = vmatpush1.bf16.msra.mxu0 %v2105
    %2984 = vmatprep.subr.bf16.mxu0 %v2108
    %2985 = vmatpush1.bf16.msra.mxu0 %v2107
    %2986 = vmatprep.subr.bf16.mxu0 %v2110
    %2987 = vmatpush1.bf16.msra.mxu0 %v2109
    %2988 = vmatprep.mubr.bf16.mxu0 %v572
    %2989 = vmatmul.mubr.bf16.gmra.mrb[0].mxu0 %v570
    %v2990 = vpop.f32.mrb[0].mxu0
    %v2991 = vadd.f32 %v2950, %v2990
    %v2992 = vpop.f32.mrb[0].mxu0
    %v2993 = vadd.f32 %v2952, %v2992
    %v2994 = vpop.f32.mrb[0].mxu0
    %v2995 = vpop.f32.mrb[0].mxu0
    %2996 = vdwg.mxu0
    %2997 = vmatprep.subr.bf16.mxu0 %v2112
    %2998 = vmatpush1.bf16.msra.mxu0 %v2111
    %2999 = vmatprep.subr.bf16.mxu0 %v2114
    %3000 = vmatpush1.bf16.msra.mxu0 %v2113
    %3001 = vmatprep.subr.bf16.mxu0 %v2116
    %3002 = vmatpush1.bf16.msra.mxu0 %v2115
    %3003 = vmatprep.subr.bf16.mxu0 %v2118
    %3004 = vmatpush1.bf16.msra.mxu0 %v2117
    %3005 = vmatprep.subr.bf16.mxu0 %v2120
    %3006 = vmatpush1.bf16.msra.mxu0 %v2119
    %3007 = vmatprep.subr.bf16.mxu0 %v2122
    %3008 = vmatpush1.bf16.msra.mxu0 %v2121
    %3009 = vmatprep.subr.bf16.mxu0 %v2124
    %3010 = vmatpush1.bf16.msra.mxu0 %v2123
    %3011 = vmatprep.subr.bf16.mxu0 %v2126
    %3012 = vmatpush1.bf16.msra.mxu0 %v2125
    %3013 = vmatprep.subr.bf16.mxu0 %v2128
    %3014 = vmatpush1.bf16.msra.mxu0 %v2127
    %3015 = vmatprep.subr.bf16.mxu0 %v2130
    %3016 = vmatpush1.bf16.msra.mxu0 %v2129
    %3017 = vmatprep.subr.bf16.mxu0 %v2132
    %3018 = vmatpush1.bf16.msra.mxu0 %v2131
    %3019 = vmatprep.subr.bf16.mxu0 %v2134
    %3020 = vmatpush1.bf16.msra.mxu0 %v2133
    %3021 = vmatprep.subr.bf16.mxu0 %v2136
    %3022 = vmatpush1.bf16.msra.mxu0 %v2135
    %3023 = vmatprep.subr.bf16.mxu0 %v2138
    %3024 = vmatpush1.bf16.msra.mxu0 %v2137
    %3025 = vmatprep.subr.bf16.mxu0 %v2140
    %3026 = vmatpush1.bf16.msra.mxu0 %v2139
    %3027 = vmatprep.subr.bf16.mxu0 %v2142
    %3028 = vmatpush1.bf16.msra.mxu0 %v2141
    %3029 = vmatprep.mubr.bf16.mxu0 %v569
    %3030 = vmatmul.mubr.bf16.gmra.mrb[0].mxu0 %v555
    %v3031 = vpop.f32.mrb[0].mxu0
    %v3032 = vadd.f32 %v2991, %v3031
    %v3033 = vpop.f32.mrb[0].mxu0
    %v3034 = vadd.f32 %v2993, %v3033
    %v3035 = vpop.f32.mrb[0].mxu0
    %v3036 = vpop.f32.mrb[0].mxu0
    %3037 = vdwg.mxu0
    %3038 = vmatprep.subr.bf16.mxu0 %v2144
    %3039 = vmatpush1.bf16.msra.mxu0 %v2143
    %3040 = vmatprep.subr.bf16.mxu0 %v2146
    %3041 = vmatpush1.bf16.msra.mxu0 %v2145
    %3042 = vmatprep.subr.bf16.mxu0 %v2148
    %3043 = vmatpush1.bf16.msra.mxu0 %v2147
    %3044 = vmatprep.subr.bf16.mxu0 %v2150
    %3045 = vmatpush1.bf16.msra.mxu0 %v2149
    %3046 = vmatprep.subr.bf16.mxu0 %v2152
    %3047 = vmatpush1.bf16.msra.mxu0 %v2151
    %3048 = vmatprep.subr.bf16.mxu0 %v2154
    %3049 = vmatpush1.bf16.msra.mxu0 %v2153
    %3050 = vmatprep.subr.bf16.mxu0 %v2156
    %3051 = vmatpush1.bf16.msra.mxu0 %v2155
    %3052 = vmatprep.subr.bf16.mxu0 %v2158
    %3053 = vmatpush1.bf16.msra.mxu0 %v2157
    %3054 = vmatprep.subr.bf16.mxu0 %v2160
    %3055 = vmatpush1.bf16.msra.mxu0 %v2159
    %3056 = vmatprep.subr.bf16.mxu0 %v2162
    %3057 = vmatpush1.bf16.msra.mxu0 %v2161
    %3058 = vmatprep.subr.bf16.mxu0 %v2164
    %3059 = vmatpush1.bf16.msra.mxu0 %v2163
    %3060 = vmatprep.subr.bf16.mxu0 %v2166
    %3061 = vmatpush1.bf16.msra.mxu0 %v2165
    %3062 = vmatprep.subr.bf16.mxu0 %v2168
    %3063 = vmatpush1.bf16.msra.mxu0 %v2167
    %3064 = vmatprep.subr.bf16.mxu0 %v2170
    %3065 = vmatpush1.bf16.msra.mxu0 %v2169
    %3066 = vmatprep.subr.bf16.mxu0 %v2172
    %3067 = vmatpush1.bf16.msra.mxu0 %v2171
    %3068 = vmatprep.subr.bf16.mxu0 %v2174
    %3069 = vmatpush1.bf16.msra.mxu0 %v2173
    %3070 = vmatprep.mubr.bf16.mxu0 %v573
    %3071 = vmatmul.mubr.bf16.gmra.mrb[0].mxu0 %v571
    %v3072 = vpop.f32.mrb[0].mxu0
    %v3073 = vadd.f32 %v3032, %v3072
    %v3074 = vpop.f32.mrb[0].mxu0
    %v3075 = vadd.f32 %v3034, %v3074
    %v3076 = vpop.f32.mrb[0].mxu0
    %v3077 = vpop.f32.mrb[0].mxu0
    %3078 = vdwg.mxu0
    %3079 = vmatprep.subr.bf16.mxu0 %v2176
    %3080 = vmatpush1.bf16.msra.mxu0 %v2175
    %3081 = vmatprep.subr.bf16.mxu0 %v2178
    %3082 = vmatpush1.bf16.msra.mxu0 %v2177
    %3083 = vmatprep.subr.bf16.mxu0 %v2180
    %3084 = vmatpush1.bf16.msra.mxu0 %v2179
    %3085 = vmatprep.subr.bf16.mxu0 %v2182
    %3086 = vmatpush1.bf16.msra.mxu0 %v2181
    %3087 = vmatprep.subr.bf16.mxu0 %v2184
    %3088 = vmatpush1.bf16.msra.mxu0 %v2183
    %3089 = vmatprep.subr.bf16.mxu0 %v2186
    %3090 = vmatpush1.bf16.msra.mxu0 %v2185
    %3091 = vmatprep.subr.bf16.mxu0 %v2188
    %3092 = vmatpush1.bf16.msra.mxu0 %v2187
    %3093 = vmatprep.subr.bf16.mxu0 %v2190
    %3094 = vmatpush1.bf16.msra.mxu0 %v2189
    %3095 = vmatprep.subr.bf16.mxu0 %v2192
    %3096 = vmatpush1.bf16.msra.mxu0 %v2191
    %3097 = vmatprep.subr.bf16.mxu0 %v2194
    %3098 = vmatpush1.bf16.msra.mxu0 %v2193
    %3099 = vmatprep.subr.bf16.mxu0 %v2196
    %3100 = vmatpush1.bf16.msra.mxu0 %v2195
    %3101 = vmatprep.subr.bf16.mxu0 %v2198
    %3102 = vmatpush1.bf16.msra.mxu0 %v2197
    %3103 = vmatprep.subr.bf16.mxu0 %v2200
    %3104 = vmatpush1.bf16.msra.mxu0 %v2199
    %3105 = vmatprep.subr.bf16.mxu0 %v2202
    %3106 = vmatpush1.bf16.msra.mxu0 %v2201
    %3107 = vmatprep.subr.bf16.mxu0 %v2204
    %3108 = vmatpush1.bf16.msra.mxu0 %v2203
    %3109 = vmatprep.subr.bf16.mxu0 %v2206
    %3110 = vmatpush1.bf16.msra.mxu0 %v2205
    %3111 = vmatprep.mubr.bf16.mxu0 %v611
    %3112 = vmatmul.mubr.bf16.gmra.mrb[0].mxu0 %v597
    %v3113 = vpop.f32.mrb[0].mxu0
    %v3114 = vadd.f32 %v3073, %v3113
    %v3115 = vpop.f32.mrb[0].mxu0
    %v3116 = vadd.f32 %v3075, %v3115
    %v3117 = vpop.f32.mrb[0].mxu0
    %v3118 = vpop.f32.mrb[0].mxu0
    %3119 = vdwg.mxu0
    %3120 = vmatprep.subr.bf16.mxu0 %v2208
    %3121 = vmatpush1.bf16.msra.mxu0 %v2207
    %3122 = vmatprep.subr.bf16.mxu0 %v2210
    %3123 = vmatpush1.bf16.msra.mxu0 %v2209
    %3124 = vmatprep.subr.bf16.mxu0 %v2212
    %3125 = vmatpush1.bf16.msra.mxu0 %v2211
    %3126 = vmatprep.subr.bf16.mxu0 %v2214
    %3127 = vmatpush1.bf16.msra.mxu0 %v2213
    %3128 = vmatprep.subr.bf16.mxu0 %v2216
    %3129 = vmatpush1.bf16.msra.mxu0 %v2215
    %3130 = vmatprep.subr.bf16.mxu0 %v2218
    %3131 = vmatpush1.bf16.msra.mxu0 %v2217
    %3132 = vmatprep.subr.bf16.mxu0 %v2220
    %3133 = vmatpush1.bf16.msra.mxu0 %v2219
    %3134 = vmatprep.subr.bf16.mxu0 %v2222
    %3135 = vmatpush1.bf16.msra.mxu0 %v2221
    %3136 = vmatprep.subr.bf16.mxu0 %v2224
    %3137 = vmatpush1.bf16.msra.mxu0 %v2223
    %3138 = vmatprep.subr.bf16.mxu0 %v2226
    %3139 = vmatpush1.bf16.msra.mxu0 %v2225
    %3140 = vmatprep.subr.bf16.mxu0 %v2228
    %3141 = vmatpush1.bf16.msra.mxu0 %v2227
    %3142 = vmatprep.subr.bf16.mxu0 %v2230
    %3143 = vmatpush1.bf16.msra.mxu0 %v2229
    %3144 = vmatprep.subr.bf16.mxu0 %v2232
    %3145 = vmatpush1.bf16.msra.mxu0 %v2231
    %3146 = vmatprep.subr.bf16.mxu0 %v2234
    %3147 = vmatpush1.bf16.msra.mxu0 %v2233
    %3148 = vmatprep.subr.bf16.mxu0 %v2236
    %3149 = vmatpush1.bf16.msra.mxu0 %v2235
    %3150 = vmatprep.subr.bf16.mxu0 %v2238
    %3151 = vmatpush1.bf16.msra.mxu0 %v2237
    %3152 = vmatprep.mubr.bf16.mxu0 %v621
    %3153 = vmatmul.mubr.bf16.gmra.mrb[0].mxu0 %v619
    %v3154 = vpop.f32.mrb[0].mxu0
    %v3155 = vadd.f32 %v3114, %v3154
    %v3156 = vpop.f32.mrb[0].mxu0
    %v3157 = vadd.f32 %v3116, %v3156
    %v3158 = vpop.f32.mrb[0].mxu0
    %v3159 = vpop.f32.mrb[0].mxu0
    %3160 = vdwg.mxu0
    %3161 = vmatprep.subr.bf16.mxu0 %v2240
    %3162 = vmatpush1.bf16.msra.mxu0 %v2239
    %3163 = vmatprep.subr.bf16.mxu0 %v2242
    %3164 = vmatpush1.bf16.msra.mxu0 %v2241
    %3165 = vmatprep.subr.bf16.mxu0 %v2244
    %3166 = vmatpush1.bf16.msra.mxu0 %v2243
    %3167 = vmatprep.subr.bf16.mxu0 %v2246
    %3168 = vmatpush1.bf16.msra.mxu0 %v2245
    %3169 = vmatprep.subr.bf16.mxu0 %v2248
    %3170 = vmatpush1.bf16.msra.mxu0 %v2247
    %3171 = vmatprep.subr.bf16.mxu0 %v2250
    %3172 = vmatpush1.bf16.msra.mxu0 %v2249
    %3173 = vmatprep.subr.bf16.mxu0 %v2252
    %3174 = vmatpush1.bf16.msra.mxu0 %v2251
    %3175 = vmatprep.subr.bf16.mxu0 %v2254
    %3176 = vmatpush1.bf16.msra.mxu0 %v2253
    %3177 = vmatprep.subr.bf16.mxu0 %v2256
    %3178 = vmatpush1.bf16.msra.mxu0 %v2255
    %3179 = vmatprep.subr.bf16.mxu0 %v2258
    %3180 = vmatpush1.bf16.msra.mxu0 %v2257
    %3181 = vmatprep.subr.bf16.mxu0 %v2260
    %3182 = vmatpush1.bf16.msra.mxu0 %v2259
    %3183 = vmatprep.subr.bf16.mxu0 %v2262
    %3184 = vmatpush1.bf16.msra.mxu0 %v2261
    %3185 = vmatprep.subr.bf16.mxu0 %v2264
    %3186 = vmatpush1.bf16.msra.mxu0 %v2263
    %3187 = vmatprep.subr.bf16.mxu0 %v2266
    %3188 = vmatpush1.bf16.msra.mxu0 %v2265
    %3189 = vmatprep.subr.bf16.mxu0 %v2268
    %3190 = vmatpush1.bf16.msra.mxu0 %v2267
    %3191 = vmatprep.subr.bf16.mxu0 %v2270
    %3192 = vmatpush1.bf16.msra.mxu0 %v2269
    %3193 = vmatprep.mubr.bf16.mxu0 %v618
    %3194 = vmatmul.mubr.bf16.gmra.mrb[0].mxu0 %v604
    %v3195 = vpop.f32.mrb[0].mxu0
    %v3196 = vadd.f32 %v3155, %v3195
    %v3197 = vpop.f32.mrb[0].mxu0
    %v3198 = vadd.f32 %v3157, %v3197
    %v3199 = vpop.f32.mrb[0].mxu0
    %v3200 = vpop.f32.mrb[0].mxu0
    %3201 = vdwg.mxu0
    %3202 = vmatprep.subr.bf16.mxu0 %v2272
    %3203 = vmatpush1.bf16.msra.mxu0 %v2271
    %3204 = vmatprep.subr.bf16.mxu0 %v2274
    %3205 = vmatpush1.bf16.msra.mxu0 %v2273
    %3206 = vmatprep.subr.bf16.mxu0 %v2276
    %3207 = vmatpush1.bf16.msra.mxu0 %v2275
    %3208 = vmatprep.subr.bf16.mxu0 %v2278
    %3209 = vmatpush1.bf16.msra.mxu0 %v2277
    %3210 = vmatprep.subr.bf16.mxu0 %v2280
    %3211 = vmatpush1.bf16.msra.mxu0 %v2279
    %3212 = vmatprep.subr.bf16.mxu0 %v2282
    %3213 = vmatpush1.bf16.msra.mxu0 %v2281
    %3214 = vmatprep.subr.bf16.mxu0 %v2284
    %3215 = vmatpush1.bf16.msra.mxu0 %v2283
    %3216 = vmatprep.subr.bf16.mxu0 %v2286
    %3217 = vmatpush1.bf16.msra.mxu0 %v2285
    %3218 = vmatprep.subr.bf16.mxu0 %v2288
    %3219 = vmatpush1.bf16.msra.mxu0 %v2287
    %3220 = vmatprep.subr.bf16.mxu0 %v2290
    %3221 = vmatpush1.bf16.msra.mxu0 %v2289
    %3222 = vmatprep.subr.bf16.mxu0 %v2292
    %3223 = vmatpush1.bf16.msra.mxu0 %v2291
    %3224 = vmatprep.subr.bf16.mxu0 %v2294
    %3225 = vmatpush1.bf16.msra.mxu0 %v2293
    %3226 = vmatprep.subr.bf16.mxu0 %v2296
    %3227 = vmatpush1.bf16.msra.mxu0 %v2295
    %3228 = vmatprep.subr.bf16.mxu0 %v2298
    %3229 = vmatpush1.bf16.msra.mxu0 %v2297
    %3230 = vmatprep.subr.bf16.mxu0 %v2300
    %3231 = vmatpush1.bf16.msra.mxu0 %v2299
    %3232 = vmatprep.subr.bf16.mxu0 %v2302
    %3233 = vmatpush1.bf16.msra.mxu0 %v2301
    %3234 = vmatprep.mubr.bf16.mxu0 %v622
    %3235 = vmatmul.mubr.bf16.gmra.mrb[0].mxu0 %v620
    %v3236 = vpop.f32.mrb[0].mxu0
    %v3237 = vadd.f32 %v3196, %v3236
    %v3238 = vpop.f32.mrb[0].mxu0
    %v3239 = vadd.f32 %v3198, %v3238
    %v3240 = vpop.f32.mrb[0].mxu0
    %v3241 = vpop.f32.mrb[0].mxu0
    %3242 = vdwg.mxu0
    %3243 = vmatprep.subr.bf16.mxu0 %v2304
    %3244 = vmatpush1.bf16.msra.mxu0 %v2303
    %3245 = vmatprep.subr.bf16.mxu0 %v2306
    %3246 = vmatpush1.bf16.msra.mxu0 %v2305
    %3247 = vmatprep.subr.bf16.mxu0 %v2308
    %3248 = vmatpush1.bf16.msra.mxu0 %v2307
    %3249 = vmatprep.subr.bf16.mxu0 %v2310
    %3250 = vmatpush1.bf16.msra.mxu0 %v2309
    %3251 = vmatprep.subr.bf16.mxu0 %v2312
    %3252 = vmatpush1.bf16.msra.mxu0 %v2311
    %3253 = vmatprep.subr.bf16.mxu0 %v2314
    %3254 = vmatpush1.bf16.msra.mxu0 %v2313
    %3255 = vmatprep.subr.bf16.mxu0 %v2316
    %3256 = vmatpush1.bf16.msra.mxu0 %v2315
    %3257 = vmatprep.subr.bf16.mxu0 %v2318
    %3258 = vmatpush1.bf16.msra.mxu0 %v2317
    %3259 = vmatprep.subr.bf16.mxu0 %v2320
    %3260 = vmatpush1.bf16.msra.mxu0 %v2319
    %3261 = vmatprep.subr.bf16.mxu0 %v2322
    %3262 = vmatpush1.bf16.msra.mxu0 %v2321
    %3263 = vmatprep.subr.bf16.mxu0 %v2324
    %3264 = vmatpush1.bf16.msra.mxu0 %v2323
    %3265 = vmatprep.subr.bf16.mxu0 %v2326
    %3266 = vmatpush1.bf16.msra.mxu0 %v2325
    %3267 = vmatprep.subr.bf16.mxu0 %v2328
    %3268 = vmatpush1.bf16.msra.mxu0 %v2327
    %3269 = vmatprep.subr.bf16.mxu0 %v2330
    %3270 = vmatpush1.bf16.msra.mxu0 %v2329
    %3271 = vmatprep.subr.bf16.mxu0 %v2332
    %3272 = vmatpush1.bf16.msra.mxu0 %v2331
    %3273 = vmatprep.subr.bf16.mxu0 %v2334
    %3274 = vmatpush1.bf16.msra.mxu0 %v2333
    %3275 = vmatprep.mubr.bf16.mxu0 %v644
    %3276 = vmatmul.mubr.bf16.gmra.mrb[0].mxu0 %v637
    %v3277 = vpop.f32.mrb[0].mxu0
    %v3278 = vadd.f32 %v3237, %v3277
    %v3279 = vpop.f32.mrb[0].mxu0
    %v3280 = vadd.f32 %v3239, %v3279
    %v3281 = vpop.f32.mrb[0].mxu0
    %v3282 = vpop.f32.mrb[0].mxu0
    %3283 = vdwg.mxu0
    %vm3284 = vcmp.gt.f32.partialorder %v3278, 0.0
    %vm3285 = vcmp.gt.f32.partialorder %v3280, 0.0
    %v3286 = vmul.f32 %v3278, 0.01
    %v3287 = vmul.f32 %v3280, 0.01
    %v3288 = vsel %vm3284, %v3278, %v3286
    %v3289 = vsel %vm3285, %v3280, %v3287
    %s3290 = scalar_lea.vmem [#allocation4], 1
    %v3291 = vld [vmem:[%s3290] ss:$4 sm:$0x3]
    %v3293 = vlaneseq
    %v3294 = vshrl.u32 %v3293, 7
    %v3295 = vsub.s32 0, %v3294
    %v3296 = vrot.slane %v3291, %v3295
    %v3297 = vlaneseq
    %v3298 = vshrl.u32 %v3297, 7
    %v3299 = vsub.s32 1, %v3298
    %v3300 = vrot.slane %v3291, %v3299
    %v3303 = vmul.f32 %v3288, %v3296
    %v3304 = vmul.f32 %v3289, %v3300
    %vm3305 = vcmask 1041408
    %v3306 = vsel %vm3305, %v3303, 0.0
    %v3307 = vsel %vm3305, %v3304, 0.0
    %v3308 = vadd.f32 %v3306, %v3307
    %3309 = vadd.xlane.f32.xlu0 %v3308
    %v3310 = vpop.xlane.xlu0 %3309
    %v3311 = vld [vmem:[#allocation4 + $0x2] sm:$0x1]
    %v3312 = vlaneseq
    %v3313 = vshrl.u32 %v3312, 7
    %v3314 = vsub.s32 0, %v3313
    %v3315 = vrot.slane %v3311, %v3314
    %v3316 = vadd.f32 %v3310, %v3315
    %v3317 = vtanh.pop %v3316
    %vm3318 = vcmask 1024
    %3319 = vst.msk [vmem:[%s3] sm:$0x3] %vm3318, %v3317
    // Predicated region
    $region22: #{value_head.1} parent=1 // pred_check
      _
    $region23: #{value_head.1} parent=1 // pred_check_branch
      %3321 = sbr.rel (0) target = $region25
    $region24: #{value_head.1} parent=1 // pred_region
      _
    $region25: #{value_head.1} parent=1 // pred_fallthru
      _
    // Predicated region
    $region26: #{value_head.1} parent=1 // pred_check
      _
    $region27: #{value_head.1} parent=1 // pred_check_branch
      %3323 = sbr.rel (0) target = $region29
    $region28: #{value_head.1} parent=1 // pred_region
      _
    $region29: #{value_head.1} parent=1 // pred_fallthru
      _
    %3324 = vsyncpa [#allocation3], 1
    %3325 = vsyncpa [#allocation5], 1

</llo_original>
